<compile_context>
chip_gen: v7x
topology: tpu7x:2x2x1
jax: 0.10.0
libtpu: 0.0.40
codegen_flags: <defaults>
</compile_context>

<pallas_src>
import functools

import numpy as np
import jax
import jax.numpy as jnp
from jax.experimental import pallas as pl
from jax.experimental.pallas import tpu as pltpu


_CP = pltpu.CompilerParams(dimension_semantics=("arbitrary",))


def _fs(shape):
    """Full-array BlockSpec (block == whole array) for a grid=(1,) kernel."""
    zeros = (0,) * len(shape)
    return pl.BlockSpec(shape, lambda *_: zeros)


# ----------------------------------------------------------------------------
# Kernel 1: fused GCNEncoder (all DGCN layers + running mean) per domain.
# ----------------------------------------------------------------------------
def _gcn_encoder_kernel(uv_ref, vu_ref, ufea_ref, vfea_ref, w_ref,
                        u_out_ref, v_out_ref, *, n_layers):
    f32 = jnp.float32
    bf16 = jnp.bfloat16
    uv = uv_ref[...]            # (Nu, Ni) bf16
    vu = vu_ref[...]            # (Ni, Nu) bf16
    u = ufea_ref[...]           # (Nu, d)  f32
    v = vfea_ref[...]           # (Ni, d)  f32
    u_sum = u
    v_sum = v
    # TODO(synk): `GCN` class body not provided in the reference; assumed the
    # standard GraphConvolution out = adj @ (x @ W).  Dropout omitted (eval
    # semantics, training=False).
    for l in range(n_layers):
        w1 = w_ref[4 * l + 0]
        w2 = w_ref[4 * l + 1]
        w3 = w_ref[4 * l + 2]
        w4 = w_ref[4 * l + 3]
        user_ho = jnp.dot(
            vu, jnp.dot(u.astype(bf16), w1, preferred_element_type=f32).astype(bf16),
            preferred_element_type=f32)                                  # (Ni, d)
        item_ho = jnp.dot(
            uv, jnp.dot(v.astype(bf16), w2, preferred_element_type=f32).astype(bf16),
            preferred_element_type=f32)                                  # (Nu, d)
        u = jnp.maximum(jnp.dot(
            uv, jnp.dot(user_ho.astype(bf16), w3, preferred_element_type=f32).astype(bf16),
            preferred_element_type=f32), 0.0)                            # (Nu, d)
        v = jnp.maximum(jnp.dot(
            vu, jnp.dot(item_ho.astype(bf16), w4, preferred_element_type=f32).astype(bf16),
            preferred_element_type=f32), 0.0)                            # (Ni, d)
        u_sum = u_sum + u
        v_sum = v_sum + v
    scale = 1.0 / float(n_layers + 1)
    u_out_ref[...] = u_sum * scale
    v_out_ref[...] = v_sum * scale


def gcn_encoder(layers, ufea, vfea, UV, VU):
    Nu, d = ufea.shape
    Ni = vfea.shape[0]
    L = len(layers)
    w = jnp.stack([lp[k] for lp in layers for k in ("w1", "w2", "w3", "w4")], axis=0)
    # TODO(synk): at production graph sizes the adj@(xW) path should use a
    # row-tiled grid ("parallel" row axis for v7x megacore, K-reduction axis
    # last with an f32 VMEM accumulator) instead of full-array blocks; at these
    # tiny demo shapes full blocks are the fastest option.
    return pl.pallas_call(
        functools.partial(_gcn_encoder_kernel, n_layers=L),
        grid=(1,),
        in_specs=[_fs((Nu, Ni)), _fs((Ni, Nu)), _fs((Nu, d)), _fs((Ni, d)),
                  _fs((4 * L, d, d))],
        out_specs=(_fs((Nu, d)), _fs((Ni, d))),
        out_shape=(jax.ShapeDtypeStruct((Nu, d), jnp.float32),
                   jax.ShapeDtypeStruct((Ni, d), jnp.float32)),
        compiler_params=_CP,
    )(UV.astype(jnp.bfloat16), VU.astype(jnp.bfloat16), ufea, vfea,
      w.astype(jnp.bfloat16))


# ----------------------------------------------------------------------------
# Kernel 2: fused "head" — disentangle x3, classifiers, attention fusion +
#           user MLPs, item MLPs, and the 4 dot scores.
# ----------------------------------------------------------------------------
def _head_kernel(u_spe_ref, items_ref, eps_ref,
                 dw1_ref, db1_ref, dw2_ref, db2_ref,
                 cw_ref, cb_ref,
                 aw1_ref, ab1_ref, aw2_ref, ab2_ref,
                 uw1_ref, ub1_ref, uw2_ref, ub2_ref,
                 iw1_ref, ib1_ref, iw2_ref, ib2_ref,
                 cls_ref, score_ref, fused_ref, *, lam, leaky):
    f32 = jnp.float32
    B = u_spe_ref.shape[1]
    D = u_spe_ref.shape[2]
    H = D // 2

    def lin(x, w, b):
        return jnp.dot(x, w, preferred_element_type=f32) + b

    def lrelu(x):
        return jnp.where(x > 0.0, x, leaky * x)

    # ---- Disentangle x3 (mu/logvar heads packed into ONE (H, 4H) matmul) ----
    def disen(idx, x):
        h1 = jnp.maximum(lin(x, dw1_ref[idx], db1_ref[idx]), 0.0)     # (B, H)
        heads = lin(h1, dw2_ref[idx], db2_ref[idx])                   # (B, 4H)
        a_mu, a_lv = heads[:, 0:H], heads[:, H:2 * H]
        b_mu, b_lv = heads[:, 2 * H:3 * H], heads[:, 3 * H:4 * H]
        eps = eps_ref[idx]                                            # (B, 2H)
        a = eps[:, 0:H] * jnp.exp(0.5 * a_lv) + a_mu
        b = eps[:, H:2 * H] * jnp.exp(0.5 * b_lv) + b_mu
        return a, b

    src_u = u_spe_ref[0]
    tgt_u = u_spe_ref[1]
    share = lam * src_u + (1.0 - lam) * tgt_u

    domain_sha, domain_spe = disen(0, share)       # disen_sha
    domain_ind_s, domain_spe_s = disen(1, src_u)   # disen_s
    domain_ind_t, domain_spe_t = disen(2, tgt_u)   # disen_t

    # ---- classifiers, row-stacked (M = 3B feeds the MXU better than B) ------
    x1 = jnp.concatenate([domain_spe_s, domain_spe_t, domain_spe], axis=0)  # (3B, H)
    x2 = jnp.concatenate([domain_sha, domain_ind_s, domain_ind_t], axis=0)  # (3B, H)
    c1 = jax.nn.sigmoid(lin(x1, cw_ref[0], cb_ref[0]))                      # (3B, 2)
    c2 = jax.nn.sigmoid(lin(x2, cw_ref[1], cb_ref[1]))                      # (3B, 2)
    cls_ref[...] = jnp.concatenate([c1, c2], axis=1)                        # (3B, 4)

    # ---- attention emb_fusion fused with the user MLP, per domain -----------
    def fuse_user(dom, spe, intm, pop):
        aw1 = aw1_ref[dom]                                                  # (3H, H)
        # concat([spe,int,pop],1) @ W1 == split-matmul sum (avoids concat)
        h = (jnp.dot(spe, aw1[0:H, :], preferred_element_type=f32)
             + jnp.dot(intm, aw1[H:2 * H, :], preferred_element_type=f32)
             + jnp.dot(pop, aw1[2 * H:3 * H, :], preferred_element_type=f32)
             + ab1_ref[dom])
        h = jnp.maximum(h, 0.0)
        logits = lin(h, aw2_ref[dom], ab2_ref[dom])                         # (B, 3)
        m = jnp.max(logits, axis=1, keepdims=True)
        e = jnp.exp(logits - m)
        att = e / jnp.sum(e, axis=1, keepdims=True)
        # (the .repeat() calls in the reference are no-ops: results discarded)
        fused = spe * att[:, 0:1] + intm * att[:, 1:2] + pop * att[:, 2:3]
        hu = lrelu(lin(fused, uw1_ref[dom], ub1_ref[dom]))                  # (B, D)
        u = lin(hu, uw2_ref[dom], ub2_ref[dom])                             # (B, H)
        return fused, u

    src_fused, u_s = fuse_user(0, domain_spe_s, domain_ind_s, domain_sha)
    tgt_fused, u_t = fuse_user(1, domain_spe_t, domain_ind_t, domain_sha)
    fused_ref[0] = src_fused
    fused_ref[1] = tgt_fused

    # ---- item MLPs (pos/neg row-stacked) + the 4 dot scores ------------------
    def item_mlp(dom, x):
        h = lrelu(lin(x, iw1_ref[dom], ib1_ref[dom]))
        return lin(h, iw2_ref[dom], ib2_ref[dom])

    v_s = item_mlp(0, jnp.concatenate([items_ref[0], items_ref[1]], axis=0))  # (2B, H)
    v_t = item_mlp(1, jnp.concatenate([items_ref[2], items_ref[3]], axis=0))  # (2B, H)

    score_ref[...] = jnp.concatenate([
        jnp.sum(u_s * v_s[0:B], axis=1, keepdims=True),
        jnp.sum(u_s * v_s[B:2 * B], axis=1, keepdims=True),
        jnp.sum(u_t * v_t[0:B], axis=1, keepdims=True),
        jnp.sum(u_t * v_t[B:2 * B], axis=1, keepdims=True)], axis=1)          # (B, 4)


def head_forward(params, src_u_spe, tgt_u_spe,
                 src_i_pos, src_i_neg, tgt_i_pos, tgt_i_neg, lam, leaky, eps):
    B, D = src_u_spe.shape
    H = D // 2

    def pack_disen(p):
        w2 = jnp.concatenate([p["w21a"], p["w22a"], p["w21b"], p["w22b"]], axis=1)
        b2 = jnp.concatenate([p["b21a"], p["b22a"], p["b21b"], p["b22b"]], axis=1)
        return p["w1"], p["b1"], w2, b2

    packed = [pack_disen(params[k]) for k in ("disen_sha", "disen_s", "disen_t")]
    dw1 = jnp.stack([q[0] for q in packed])      # (3, D, H)
    db1 = jnp.stack([q[1] for q in packed])      # (3, 1, H)
    dw2 = jnp.stack([q[2] for q in packed])      # (3, H, 4H)
    db2 = jnp.stack([q[3] for q in packed])      # (3, 1, 4H)

    cw = jnp.stack([params["cls_1"]["w"], params["cls_2"]["w"]])   # (2, H, 2)
    cb = jnp.stack([params["cls_1"]["b"], params["cls_2"]["b"]])   # (2, 1, 2)

    def stack2(ka, kb, name):
        return jnp.stack([params[ka][name], params[kb][name]])

    aw1 = stack2("att_s", "att_t", "w1"); ab1 = stack2("att_s", "att_t", "b1")
    aw2 = stack2("att_s", "att_t", "w2"); ab2 = stack2("att_s", "att_t", "b2")
    uw1 = stack2("mlp_user_s", "mlp_user_t", "w1"); ub1 = stack2("mlp_user_s", "mlp_user_t", "b1")
    uw2 = stack2("mlp_user_s", "mlp_user_t", "w2"); ub2 = stack2("mlp_user_s", "mlp_user_t", "b2")
    iw1 = stack2("mlp_item_s", "mlp_item_t", "w1"); ib1 = stack2("mlp_item_s", "mlp_item_t", "b1")
    iw2 = stack2("mlp_item_s", "mlp_item_t", "w2"); ib2 = stack2("mlp_item_s", "mlp_item_t", "b2")

    u_spe = jnp.stack([src_u_spe, tgt_u_spe])                         # (2, B, D)
    items = jnp.stack([src_i_pos, src_i_neg, tgt_i_pos, tgt_i_neg])   # (4, B, D)

    operands = (u_spe, items, eps, dw1, db1, dw2, db2, cw, cb,
                aw1, ab1, aw2, ab2, uw1, ub1, uw2, ub2, iw1, ib1, iw2, ib2)

    return pl.pallas_call(
        functools.partial(_head_kernel, lam=lam, leaky=leaky),
        grid=(1,),
        in_specs=[_fs(op.shape) for op in operands],
        out_specs=(_fs((3 * B, 4)), _fs((B, 4)), _fs((2, B, H))),
        out_shape=(jax.ShapeDtypeStruct((3 * B, 4), jnp.float32),
                   jax.ShapeDtypeStruct((B, 4), jnp.float32),
                   jax.ShapeDtypeStruct((2, B, H), jnp.float32)),
        compiler_params=_CP,
    )(*operands)


# ----------------------------------------------------------------------------
# Loss glue (plain JAX)
# ----------------------------------------------------------------------------
def cross_entropy(logits, labels):
    logp = jax.nn.log_softmax(logits, axis=1)
    return -jnp.mean(jnp.take_along_axis(logp, labels[:, None], axis=1)[:, 0])


def kld_batchmean(log_probs, target):
    return jnp.sum(target * (jnp.log(target) - log_probs)) / target.shape[0]


def bce_with_logits(logits, labels):
    return jnp.mean(jnp.maximum(logits, 0.0) - logits * labels
                    + jnp.log1p(jnp.exp(-jnp.abs(logits))))


# ----------------------------------------------------------------------------
# Full forward pass
# ----------------------------------------------------------------------------
def dida_cdr_forward(params, opt, adjs, batch, lam, rng):
    leaky = opt["leaky"]

    # ---- get_G_emb (2 fused pallas_calls) ------------------------------------
    user_G_s, item_G_s = gcn_encoder(params["gcn_s"],
                                     params["emb"]["source_user"],
                                     params["emb"]["source_item"],
                                     adjs["source_UV"], adjs["source_VU"])
    user_G_t, item_G_t = gcn_encoder(params["gcn_t"],
                                     params["emb"]["target_user"],
                                     params["emb"]["target_item"],
                                     adjs["target_UV"], adjs["target_VU"])

    user = batch["user"]
    src_u_spe = jnp.take(user_G_s, user, axis=0)
    tgt_u_spe = jnp.take(user_G_t, user, axis=0)
    src_i_pos = jnp.take(item_G_s, batch["source_pos_item"], axis=0)
    tgt_i_pos = jnp.take(item_G_t, batch["target_pos_item"], axis=0)
    src_i_neg = jnp.take(item_G_s, batch["source_neg_item"], axis=0)
    tgt_i_neg = jnp.take(item_G_t, batch["target_neg_item"], axis=0)

    B = user.shape[0]
    D = src_u_spe.shape[1]
    # TODO(synk): eps could be drawn in-kernel (pltpu.prng_seed + stateful_normal)
    # to drop this one input DMA; kept host-side for deterministic jax.random.
    eps = jax.random.normal(rng, (3, B, D), jnp.float32)

    # ---- fused head (1 pallas_call) ------------------------------------------
    cls_out, scores, fused = head_forward(params, src_u_spe, tgt_u_spe,
                                          src_i_pos, src_i_neg,
                                          tgt_i_pos, tgt_i_neg,
                                          lam, leaky, eps)

    y_sha = jnp.ones((B, 2), jnp.float32) / 2.0
    ones_lbl = jnp.ones((B,), jnp.int32)
    zeros_lbl = jnp.zeros((B,), jnp.int32)

    c1 = cls_out[:, 0:2]       # cls_1 sigmoid outputs on [spe_s; spe_t; spe]
    c2 = cls_out[:, 2:4]       # cls_2 sigmoid outputs on [sha; ind_s; ind_t]
    p_spe_s, p_spe_t, p_spe = c1[0:B], c1[B:2 * B], c1[2 * B:3 * B]
    q_sha, q_ind_s, q_ind_t = c2[0:B], c2[B:2 * B], c2[2 * B:3 * B]

    loss_cls1 = (1.0 / 3.0) * (
        cross_entropy(p_spe_s, ones_lbl)
        + cross_entropy(p_spe_t, zeros_lbl)
        + lam * cross_entropy(p_spe, ones_lbl)
        + (1.0 - lam) * cross_entropy(p_spe, zeros_lbl))

    loss_cls2 = (1.0 / 3.0) * (
        kld_batchmean(jax.nn.log_softmax(q_sha, axis=1), y_sha)
        + kld_batchmean(jax.nn.log_softmax(q_ind_s, axis=1), y_sha)
        + kld_batchmean(jax.nn.log_softmax(q_ind_t, axis=1), y_sha))

    pos_src, neg_src = scores[:, 0], scores[:, 1]
    pos_tgt, neg_tgt = scores[:, 2], scores[:, 3]
    pos_labels = jnp.ones_like(pos_src)
    neg_labels = jnp.zeros_like(pos_src)
    loss = (bce_with_logits(pos_src, pos_labels) + bce_with_logits(neg_src, neg_labels)
            + bce_with_logits(pos_tgt, pos_labels) + bce_with_logits(neg_tgt, neg_labels))

    reg_loss = 0.5 * (jnp.sum(fused[0] ** 2) + jnp.sum(fused[1] ** 2)
                      + jnp.sum(src_i_pos ** 2) + jnp.sum(tgt_i_pos ** 2)
                      + jnp.sum(src_i_neg ** 2) + jnp.sum(tgt_i_neg ** 2)) / float(B)

    all_loss = (loss + opt["lambda1"] * loss_cls1 + opt["lambda2"] * loss_cls2
                + opt["reg_weight"] * reg_loss)
    return all_loss


# ----------------------------------------------------------------------------
# Deterministic parameter construction
# ----------------------------------------------------------------------------
def _init_lin(key, fin, fout, scale=0.1):
    kw, kb = jax.random.split(key)
    return (jax.random.normal(kw, (fin, fout), jnp.float32) * scale,
            jax.random.normal(kb, (1, fout), jnp.float32) * scale)


def build_params(key, opt):
    d = opt["feature_dim"]
    h = d // 2
    keys = iter(jax.random.split(key, 256))

    def lin(fin, fout):
        return _init_lin(next(keys), fin, fout)

    def disen_params():
        w1, b1 = lin(d, h)
        w21a, b21a = lin(h, h)
        w22a, b22a = lin(h, h)
        w21b, b21b = lin(h, h)
        w22b, b22b = lin(h, h)
        return dict(w1=w1, b1=b1, w21a=w21a, b21a=b21a, w22a=w22a, b22a=b22a,
                    w21b=w21b, b21b=b21b, w22b=w22b, b22b=b22b)

    def gcn_layers():
        layers = []
        for _ in range(opt["GNN"]):
            layers.append(dict(
                w1=jax.random.normal(next(keys), (d, d), jnp.float32) * 0.1,
                w2=jax.random.normal(next(keys), (d, d), jnp.float32) * 0.1,
                w3=jax.random.normal(next(keys), (d, d), jnp.float32) * 0.1,
                w4=jax.random.normal(next(keys), (d, d), jnp.float32) * 0.1))
        return layers

    def att_params():
        w1, b1 = lin(3 * h, h)
        w2, b2 = lin(h, 3)
        return dict(w1=w1, b1=b1, w2=w2, b2=b2)

    def mlp_params(fin):
        w1, b1 = lin(fin, d)
        w2, b2 = lin(d, h)
        return dict(w1=w1, b1=b1, w2=w2, b2=b2)

    params = dict(
        emb=dict(
            source_user=jax.random.normal(next(keys), (opt["source_user_num"], d), jnp.float32) * 0.1,
            target_user=jax.random.normal(next(keys), (opt["target_user_num"], d), jnp.float32) * 0.1,
            source_item=jax.random.normal(next(keys), (opt["source_item_num"], d), jnp.float32) * 0.1,
            target_item=jax.random.normal(next(keys), (opt["target_item_num"], d), jnp.float32) * 0.1),
        gcn_s=gcn_layers(),
        gcn_t=gcn_layers(),
        disen_s=disen_params(),
        disen_t=disen_params(),
        disen_sha=disen_params(),
        att_s=att_params(),
        att_t=att_params(),
        cls_1=dict(zip(("w", "b"), lin(h, 2))),
        cls_2=dict(zip(("w", "b"), lin(h, 2))),
        mlp_user_s=mlp_params(h),
        mlp_user_t=mlp_params(h),
        mlp_item_s=mlp_params(d),
        mlp_item_t=mlp_params(d),
    )
    return params


if __name__ == "__main__":
    opt = dict(feature_dim=32, GNN=2, leaky=0.2, dropout=0.3,
               lambda1=0.1, lambda2=0.1, reg_weight=1e-4,
               source_user_num=16, target_user_num=16,
               source_item_num=16, target_item_num=16)

    key = jax.random.PRNGKey(0)
    k_params, k_adj, k_batch, k_noise = jax.random.split(key, 4)
    params = build_params(k_params, opt)

    # random (row-normalized) bipartite adjacencies
    ka1, ka2 = jax.random.split(k_adj)
    a_s = (jax.random.uniform(ka1, (opt["source_user_num"], opt["source_item_num"])) > 0.5).astype(jnp.float32)
    a_t = (jax.random.uniform(ka2, (opt["target_user_num"], opt["target_item_num"])) > 0.5).astype(jnp.float32)

    def row_norm(m):
        return m / jnp.maximum(jnp.sum(m, axis=1, keepdims=True), 1.0)

    adjs = dict(source_UV=row_norm(a_s), source_VU=row_norm(a_s.T),
                target_UV=row_norm(a_t), target_VU=row_norm(a_t.T))

    B = 8
    kb = jax.random.split(k_batch, 5)
    batch = dict(
        user=jax.random.randint(kb[0], (B,), 0, opt["source_user_num"]),
        source_pos_item=jax.random.randint(kb[1], (B,), 0, opt["source_item_num"]),
        source_neg_item=jax.random.randint(kb[2], (B,), 0, opt["source_item_num"]),
        target_pos_item=jax.random.randint(kb[3], (B,), 0, opt["target_item_num"]),
        target_neg_item=jax.random.randint(kb[4], (B,), 0, opt["target_item_num"]),
    )

    # mixup lambda ~ Beta(1,1), drawn deterministically (matches np.random.beta)
    lam = float(np.random.RandomState(0).beta(1.0, 1.0))

    all_loss = dida_cdr_forward(params, opt, adjs, batch, lam, k_noise)
    all_loss = jax.block_until_ready(all_loss)
    assert all_loss.shape == () and bool(jnp.isfinite(all_loss))
    print("KERNEL_OK")
</pallas_src>

<mosaic_0001>
module attributes {stable_mosaic.version = 11 : i64} {
  func.func @_gcn_encoder_kernel(%arg0: i32, %arg1: memref<16x16xbf16, #tpu.memory_space<vmem>>, %arg2: memref<16x16xbf16, #tpu.memory_space<vmem>>, %arg3: memref<16x32xf32, #tpu.memory_space<vmem>>, %arg4: memref<16x32xf32, #tpu.memory_space<vmem>>, %arg5: memref<8x32x32xbf16, #tpu.memory_space<vmem>>, %arg6: memref<16x32xf32, #tpu.memory_space<vmem>>, %arg7: memref<16x32xf32, #tpu.memory_space<vmem>>) attributes {dimension_semantics = [#tpu.dimension_semantics<arbitrary>], iteration_bounds = array<i64: 1>, scalar_prefetch = 0 : i64, scratch_operands = 0 : i64, tpu.core_type = #tpu.core_type<tc>, window_params = [{pipeline_mode = #tpu.pipeline_mode<synchronous>, transform_indices = @transform_0, window_bounds = array<i64: 16, 16>}, {pipeline_mode = #tpu.pipeline_mode<synchronous>, transform_indices = @transform_1, window_bounds = array<i64: 16, 16>}, {pipeline_mode = #tpu.pipeline_mode<synchronous>, transform_indices = @transform_2, window_bounds = array<i64: 16, 32>}, {pipeline_mode = #tpu.pipeline_mode<synchronous>, transform_indices = @transform_3, window_bounds = array<i64: 16, 32>}, {pipeline_mode = #tpu.pipeline_mode<synchronous>, transform_indices = @transform_4, window_bounds = array<i64: 8, 32, 32>}, {pipeline_mode = #tpu.pipeline_mode<synchronous>, transform_indices = @transform_5, window_bounds = array<i64: 16, 32>}, {pipeline_mode = #tpu.pipeline_mode<synchronous>, transform_indices = @transform_6, window_bounds = array<i64: 16, 32>}]} {
    %c0 = arith.constant 0 : index
    %c0_0 = arith.constant 0 : index
    %0 = vector.load %arg1[%c0, %c0_0] : memref<16x16xbf16, #tpu.memory_space<vmem>>, vector<16x16xbf16>
    %c0_1 = arith.constant 0 : index
    %c0_2 = arith.constant 0 : index
    %1 = vector.load %arg2[%c0_1, %c0_2] : memref<16x16xbf16, #tpu.memory_space<vmem>>, vector<16x16xbf16>
    %c0_3 = arith.constant 0 : index
    %c0_4 = arith.constant 0 : index
    %2 = vector.load %arg3[%c0_3, %c0_4] : memref<16x32xf32, #tpu.memory_space<vmem>>, vector<16x32xf32>
    %c0_5 = arith.constant 0 : index
    %c0_6 = arith.constant 0 : index
    %3 = vector.load %arg4[%c0_5, %c0_6] : memref<16x32xf32, #tpu.memory_space<vmem>>, vector<16x32xf32>
    %c0_7 = arith.constant 0 : index
    %c0_8 = arith.constant 0 : index
    %c0_9 = arith.constant 0 : index
    %4 = vector.load %arg5[%c0_7, %c0_8, %c0_9] : memref<8x32x32xbf16, #tpu.memory_space<vmem>>, vector<1x32x32xbf16>
    %5 = vector.shape_cast %4 : vector<1x32x32xbf16> to vector<32x32xbf16>
    %c1 = arith.constant 1 : index
    %c0_10 = arith.constant 0 : index
    %c0_11 = arith.constant 0 : index
    %6 = vector.load %arg5[%c1, %c0_10, %c0_11] : memref<8x32x32xbf16, #tpu.memory_space<vmem>>, vector<1x32x32xbf16>
    %7 = vector.shape_cast %6 : vector<1x32x32xbf16> to vector<32x32xbf16>
    %c2 = arith.constant 2 : index
    %c0_12 = arith.constant 0 : index
    %c0_13 = arith.constant 0 : index
    %8 = vector.load %arg5[%c2, %c0_12, %c0_13] : memref<8x32x32xbf16, #tpu.memory_space<vmem>>, vector<1x32x32xbf16>
    %9 = vector.shape_cast %8 : vector<1x32x32xbf16> to vector<32x32xbf16>
    %c3 = arith.constant 3 : index
    %c0_14 = arith.constant 0 : index
    %c0_15 = arith.constant 0 : index
    %10 = vector.load %arg5[%c3, %c0_14, %c0_15] : memref<8x32x32xbf16, #tpu.memory_space<vmem>>, vector<1x32x32xbf16>
    %11 = vector.shape_cast %10 : vector<1x32x32xbf16> to vector<32x32xbf16>
    %12 = arith.truncf %2 : vector<16x32xf32> to vector<16x32xbf16>
    %cst = arith.constant dense<0.000000e+00> : vector<16x32xf32>
    %13 = tpu.matmul %12, %5, %cst {dimension_numbers = #tpu.dot_dimension_numbers<[1], [0], [0], [1], [0, 0, 1, 1], [], []>} : vector<16x32xbf16>, vector<32x32xbf16>, vector<16x32xf32> -> vector<16x32xf32>
    %14 = arith.truncf %13 : vector<16x32xf32> to vector<16x32xbf16>
    %cst_16 = arith.constant dense<0.000000e+00> : vector<16x32xf32>
    %15 = tpu.matmul %1, %14, %cst_16 {dimension_numbers = #tpu.dot_dimension_numbers<[1], [0], [0], [1], [0, 0, 1, 1], [], []>} : vector<16x16xbf16>, vector<16x32xbf16>, vector<16x32xf32> -> vector<16x32xf32>
    %16 = arith.truncf %3 : vector<16x32xf32> to vector<16x32xbf16>
    %cst_17 = arith.constant dense<0.000000e+00> : vector<16x32xf32>
    %17 = tpu.matmul %16, %7, %cst_17 {dimension_numbers = #tpu.dot_dimension_numbers<[1], [0], [0], [1], [0, 0, 1, 1], [], []>} : vector<16x32xbf16>, vector<32x32xbf16>, vector<16x32xf32> -> vector<16x32xf32>
    %18 = arith.truncf %17 : vector<16x32xf32> to vector<16x32xbf16>
    %cst_18 = arith.constant dense<0.000000e+00> : vector<16x32xf32>
    %19 = tpu.matmul %0, %18, %cst_18 {dimension_numbers = #tpu.dot_dimension_numbers<[1], [0], [0], [1], [0, 0, 1, 1], [], []>} : vector<16x16xbf16>, vector<16x32xbf16>, vector<16x32xf32> -> vector<16x32xf32>
    %20 = arith.truncf %15 : vector<16x32xf32> to vector<16x32xbf16>
    %cst_19 = arith.constant dense<0.000000e+00> : vector<16x32xf32>
    %21 = tpu.matmul %20, %9, %cst_19 {dimension_numbers = #tpu.dot_dimension_numbers<[1], [0], [0], [1], [0, 0, 1, 1], [], []>} : vector<16x32xbf16>, vector<32x32xbf16>, vector<16x32xf32> -> vector<16x32xf32>
    %22 = arith.truncf %21 : vector<16x32xf32> to vector<16x32xbf16>
    %cst_20 = arith.constant dense<0.000000e+00> : vector<16x32xf32>
    %23 = tpu.matmul %0, %22, %cst_20 {dimension_numbers = #tpu.dot_dimension_numbers<[1], [0], [0], [1], [0, 0, 1, 1], [], []>} : vector<16x16xbf16>, vector<16x32xbf16>, vector<16x32xf32> -> vector<16x32xf32>
    %cst_21 = arith.constant 0.000000e+00 : f32
    %24 = vector.broadcast %cst_21 : f32 to vector<16x32xf32>
    %25 = arith.maximumf %23, %24 : vector<16x32xf32>
    %26 = arith.truncf %19 : vector<16x32xf32> to vector<16x32xbf16>
    %cst_22 = arith.constant dense<0.000000e+00> : vector<16x32xf32>
    %27 = tpu.matmul %26, %11, %cst_22 {dimension_numbers = #tpu.dot_dimension_numbers<[1], [0], [0], [1], [0, 0, 1, 1], [], []>} : vector<16x32xbf16>, vector<32x32xbf16>, vector<16x32xf32> -> vector<16x32xf32>
    %28 = arith.truncf %27 : vector<16x32xf32> to vector<16x32xbf16>
    %cst_23 = arith.constant dense<0.000000e+00> : vector<16x32xf32>
    %29 = tpu.matmul %1, %28, %cst_23 {dimension_numbers = #tpu.dot_dimension_numbers<[1], [0], [0], [1], [0, 0, 1, 1], [], []>} : vector<16x16xbf16>, vector<16x32xbf16>, vector<16x32xf32> -> vector<16x32xf32>
    %cst_24 = arith.constant 0.000000e+00 : f32
    %30 = vector.broadcast %cst_24 : f32 to vector<16x32xf32>
    %31 = arith.maximumf %29, %30 : vector<16x32xf32>
    %32 = arith.addf %2, %25 : vector<16x32xf32>
    %33 = arith.addf %3, %31 : vector<16x32xf32>
    %c4 = arith.constant 4 : index
    %c0_25 = arith.constant 0 : index
    %c0_26 = arith.constant 0 : index
    %34 = vector.load %arg5[%c4, %c0_25, %c0_26] : memref<8x32x32xbf16, #tpu.memory_space<vmem>>, vector<1x32x32xbf16>
    %35 = vector.shape_cast %34 : vector<1x32x32xbf16> to vector<32x32xbf16>
    %c5 = arith.constant 5 : index
    %c0_27 = arith.constant 0 : index
    %c0_28 = arith.constant 0 : index
    %36 = vector.load %arg5[%c5, %c0_27, %c0_28] : memref<8x32x32xbf16, #tpu.memory_space<vmem>>, vector<1x32x32xbf16>
    %37 = vector.shape_cast %36 : vector<1x32x32xbf16> to vector<32x32xbf16>
    %c6 = arith.constant 6 : index
    %c0_29 = arith.constant 0 : index
    %c0_30 = arith.constant 0 : index
    %38 = vector.load %arg5[%c6, %c0_29, %c0_30] : memref<8x32x32xbf16, #tpu.memory_space<vmem>>, vector<1x32x32xbf16>
    %39 = vector.shape_cast %38 : vector<1x32x32xbf16> to vector<32x32xbf16>
    %c7 = arith.constant 7 : index
    %c0_31 = arith.constant 0 : index
    %c0_32 = arith.constant 0 : index
    %40 = vector.load %arg5[%c7, %c0_31, %c0_32] : memref<8x32x32xbf16, #tpu.memory_space<vmem>>, vector<1x32x32xbf16>
    %41 = vector.shape_cast %40 : vector<1x32x32xbf16> to vector<32x32xbf16>
    %42 = arith.truncf %25 : vector<16x32xf32> to vector<16x32xbf16>
    %cst_33 = arith.constant dense<0.000000e+00> : vector<16x32xf32>
    %43 = tpu.matmul %42, %35, %cst_33 {dimension_numbers = #tpu.dot_dimension_numbers<[1], [0], [0], [1], [0, 0, 1, 1], [], []>} : vector<16x32xbf16>, vector<32x32xbf16>, vector<16x32xf32> -> vector<16x32xf32>
    %44 = arith.truncf %43 : vector<16x32xf32> to vector<16x32xbf16>
    %cst_34 = arith.constant dense<0.000000e+00> : vector<16x32xf32>
    %45 = tpu.matmul %1, %44, %cst_34 {dimension_numbers = #tpu.dot_dimension_numbers<[1], [0], [0], [1], [0, 0, 1, 1], [], []>} : vector<16x16xbf16>, vector<16x32xbf16>, vector<16x32xf32> -> vector<16x32xf32>
    %46 = arith.truncf %31 : vector<16x32xf32> to vector<16x32xbf16>
    %cst_35 = arith.constant dense<0.000000e+00> : vector<16x32xf32>
    %47 = tpu.matmul %46, %37, %cst_35 {dimension_numbers = #tpu.dot_dimension_numbers<[1], [0], [0], [1], [0, 0, 1, 1], [], []>} : vector<16x32xbf16>, vector<32x32xbf16>, vector<16x32xf32> -> vector<16x32xf32>
    %48 = arith.truncf %47 : vector<16x32xf32> to vector<16x32xbf16>
    %cst_36 = arith.constant dense<0.000000e+00> : vector<16x32xf32>
    %49 = tpu.matmul %0, %48, %cst_36 {dimension_numbers = #tpu.dot_dimension_numbers<[1], [0], [0], [1], [0, 0, 1, 1], [], []>} : vector<16x16xbf16>, vector<16x32xbf16>, vector<16x32xf32> -> vector<16x32xf32>
    %50 = arith.truncf %45 : vector<16x32xf32> to vector<16x32xbf16>
    %cst_37 = arith.constant dense<0.000000e+00> : vector<16x32xf32>
    %51 = tpu.matmul %50, %39, %cst_37 {dimension_numbers = #tpu.dot_dimension_numbers<[1], [0], [0], [1], [0, 0, 1, 1], [], []>} : vector<16x32xbf16>, vector<32x32xbf16>, vector<16x32xf32> -> vector<16x32xf32>
    %52 = arith.truncf %51 : vector<16x32xf32> to vector<16x32xbf16>
    %cst_38 = arith.constant dense<0.000000e+00> : vector<16x32xf32>
    %53 = tpu.matmul %0, %52, %cst_38 {dimension_numbers = #tpu.dot_dimension_numbers<[1], [0], [0], [1], [0, 0, 1, 1], [], []>} : vector<16x16xbf16>, vector<16x32xbf16>, vector<16x32xf32> -> vector<16x32xf32>
    %cst_39 = arith.constant 0.000000e+00 : f32
    %54 = vector.broadcast %cst_39 : f32 to vector<16x32xf32>
    %55 = arith.maximumf %53, %54 : vector<16x32xf32>
    %56 = arith.truncf %49 : vector<16x32xf32> to vector<16x32xbf16>
    %cst_40 = arith.constant dense<0.000000e+00> : vector<16x32xf32>
    %57 = tpu.matmul %56, %41, %cst_40 {dimension_numbers = #tpu.dot_dimension_numbers<[1], [0], [0], [1], [0, 0, 1, 1], [], []>} : vector<16x32xbf16>, vector<32x32xbf16>, vector<16x32xf32> -> vector<16x32xf32>
    %58 = arith.truncf %57 : vector<16x32xf32> to vector<16x32xbf16>
    %cst_41 = arith.constant dense<0.000000e+00> : vector<16x32xf32>
    %59 = tpu.matmul %1, %58, %cst_41 {dimension_numbers = #tpu.dot_dimension_numbers<[1], [0], [0], [1], [0, 0, 1, 1], [], []>} : vector<16x16xbf16>, vector<16x32xbf16>, vector<16x32xf32> -> vector<16x32xf32>
    %cst_42 = arith.constant 0.000000e+00 : f32
    %60 = vector.broadcast %cst_42 : f32 to vector<16x32xf32>
    %61 = arith.maximumf %59, %60 : vector<16x32xf32>
    %62 = arith.addf %32, %55 : vector<16x32xf32>
    %63 = arith.addf %33, %61 : vector<16x32xf32>
    %cst_43 = arith.constant 0.333333343 : f32
    %64 = vector.broadcast %cst_43 : f32 to vector<16x32xf32>
    %65 = arith.mulf %62, %64 : vector<16x32xf32>
    %c0_44 = arith.constant 0 : index
    %c0_45 = arith.constant 0 : index
    %66 = vector.load %arg6[%c0_44, %c0_45] : memref<16x32xf32, #tpu.memory_space<vmem>>, vector<16x32xf32>
    tpu.vector_store %arg6[%c0_44, %c0_45], %65 {strides = array<i32>} : memref<16x32xf32, #tpu.memory_space<vmem>>, vector<16x32xf32>,
    %cst_46 = arith.constant 0.333333343 : f32
    %67 = vector.broadcast %cst_46 : f32 to vector<16x32xf32>
    %68 = arith.mulf %63, %67 : vector<16x32xf32>
    %c0_47 = arith.constant 0 : index
    %c0_48 = arith.constant 0 : index
    %69 = vector.load %arg7[%c0_47, %c0_48] : memref<16x32xf32, #tpu.memory_space<vmem>>, vector<16x32xf32>
    tpu.vector_store %arg7[%c0_47, %c0_48], %68 {strides = array<i32>} : memref<16x32xf32, #tpu.memory_space<vmem>>, vector<16x32xf32>,
    return
  }
  func.func @transform_0(%arg0: i32) -> (i32, i32) {
    %c0_i32 = arith.constant 0 : i32
    %c0_i32_0 = arith.constant 0 : i32
    %c0_i32_1 = arith.constant 0 : i32
    return %c0_i32, %c0_i32_0 : i32, i32
  }
  func.func @transform_1(%arg0: i32) -> (i32, i32) {
    %c0_i32 = arith.constant 0 : i32
    %c0_i32_0 = arith.constant 0 : i32
    %c0_i32_1 = arith.constant 0 : i32
    return %c0_i32, %c0_i32_0 : i32, i32
  }
  func.func @transform_2(%arg0: i32) -> (i32, i32) {
    %c0_i32 = arith.constant 0 : i32
    %c0_i32_0 = arith.constant 0 : i32
    %c0_i32_1 = arith.constant 0 : i32
    return %c0_i32, %c0_i32_0 : i32, i32
  }
  func.func @transform_3(%arg0: i32) -> (i32, i32) {
    %c0_i32 = arith.constant 0 : i32
    %c0_i32_0 = arith.constant 0 : i32
    %c0_i32_1 = arith.constant 0 : i32
    return %c0_i32, %c0_i32_0 : i32, i32
  }
  func.func @transform_4(%arg0: i32) -> (i32, i32, i32) {
    %c0_i32 = arith.constant 0 : i32
    %c0_i32_0 = arith.constant 0 : i32
    %c0_i32_1 = arith.constant 0 : i32
    %c0_i32_2 = arith.constant 0 : i32
    return %c0_i32, %c0_i32_0, %c0_i32_1 : i32, i32, i32
  }
  func.func @transform_5(%arg0: i32) -> (i32, i32) {
    %c0_i32 = arith.constant 0 : i32
    %c0_i32_0 = arith.constant 0 : i32
    %c0_i32_1 = arith.constant 0 : i32
    return %c0_i32, %c0_i32_0 : i32, i32
  }
  func.func @transform_6(%arg0: i32) -> (i32, i32) {
    %c0_i32 = arith.constant 0 : i32
    %c0_i32_0 = arith.constant 0 : i32
    %c0_i32_1 = arith.constant 0 : i32
    return %c0_i32, %c0_i32_0 : i32, i32
  }
}

</mosaic_0001>

<llo_original>
// kernel: tpu_custom_call.1
$region0: #{tpu_custom_call.1}
  #allocation0 [shape = 'u32[]', space=smem, size = 0x4, offset = 0x4, fixed_abs, tag = 'smem constant byte address 0x4 - core index']
  #allocation1 [shape = 'u32[144,128]{1,0:T(1,128)}', space=vmem, size = 0x12000, scoped, tag = 'internal scratch']
  %s0 = inlined_call_operand.hbm [shape: bf16[16,16], index: 0, kind: input, shape index: {}]
  %s1 = inlined_call_operand.hbm [shape: bf16[16,16], index: 1, kind: input, shape index: {}]
  %s2 = inlined_call_operand.hbm [shape: f32[16,32], index: 2, kind: input, shape index: {}]
  %s3 = inlined_call_operand.hbm [shape: f32[16,32], index: 3, kind: input, shape index: {}]
  %s4 = inlined_call_operand.hbm [shape: bf16[8,32,32], index: 4, kind: input, shape index: {}]
  %s5 = inlined_call_operand.hbm [shape: f32[16,32], index: 5, kind: output, shape index: {0}]
  %s6 = inlined_call_operand.hbm [shape: f32[16,32], index: 6, kind: output, shape index: {1}]
  %7 = xla_tuple %s5, %s6
  %s8 = sld [smem:[#allocation0]]
  $region58: #{tpu_custom_call.1} parent=0
    _
  %s10 = ssub.s32 1, %s8
  %s11 = scalar_select 0, %s10, %s8
  $region1: #{tpu_custom_call.1} parent=0
    #allocation2 [shape = 'u8[4096]{0}', space=vmem, size = 0x1000, scoped, tag = 'input window, operand 0, single buffered']
    #allocation3 [shape = 's32[1]{0}', space=sflag, size = 0x4, scoped, tag = 'scoped memory for tpu_custom_call.1']
    #allocation4 [shape = 's32[1]{0}', space=sflag, size = 0x4, scoped, tag = 'scoped memory for tpu_custom_call.1']
    #allocation5 [shape = 'u8[4096]{0}', space=vmem, size = 0x1000, scoped, tag = 'input window, operand 1, single buffered']
    #allocation6 [shape = 's32[1]{0}', space=sflag, size = 0x4, scoped, tag = 'scoped memory for tpu_custom_call.1']
    #allocation7 [shape = 'u8[8192]{0}', space=vmem, size = 0x2000, scoped, tag = 'input window, operand 2, single buffered']
    #allocation8 [shape = 'u8[8192]{0}', space=vmem, size = 0x2000, scoped, tag = 'input window, operand 3, single buffered']
    #allocation9 [shape = 's32[1]{0}', space=sflag, size = 0x4, scoped, tag = 'scoped memory for tpu_custom_call.1']
    #allocation10 [shape = 'u8[65536]{0}', space=vmem, size = 0x10000, scoped, tag = 'input window, operand 4, single buffered']
    #allocation11 [shape = 'u8[8192]{0}', space=vmem, size = 0x2000, scoped, tag = 'output window, operand 0, single buffered']
    #allocation12 [shape = 'u8[8192]{0}', space=vmem, size = 0x2000, scoped, tag = 'output window, operand 1, single buffered']
    #allocation13 [shape = 's32[1]{0}', space=sflag, size = 0x4, scoped, tag = 'scoped memory for tpu_custom_call.1']
    %12 = vsyncpa [#allocation3], 0
    %13 = vsyncpa [#allocation6], 0
    %14 = vsyncpa [#allocation9], 0
    %15 = vsyncpa [#allocation4], 0
    %16 = vsyncpa [#allocation13], 0
    // Predicated region
    $region2: #{tpu_custom_call.1} parent=1 // pred_check
      _
    $region3: #{tpu_custom_call.1} parent=1 // pred_check_branch
      %18 = sbr.rel (0) target = $region5
    $region4: #{tpu_custom_call.1} parent=1 // pred_region
      %s20 = ssub.s32 128, 128
      %21 = vsyncadd [#allocation3], %s20
      %s22 = sshll.u32 [#allocation2], 4
      %s23 = int_to_ptr.vmem [resolvable:$true] %s22
      %28 = dma.hbm_to_vmem [thread:$0]  %s0, 128, %s23, [#allocation3], 64, 64, 4
    $region5: #{tpu_custom_call.1} parent=1 // pred_fallthru
      _
    // Predicated region
    $region6: #{tpu_custom_call.1} parent=1 // pred_check
      _
    $region7: #{tpu_custom_call.1} parent=1 // pred_check_branch
      %30 = sbr.rel (0) target = $region9
    $region8: #{tpu_custom_call.1} parent=1 // pred_region
      %s32 = ssub.s32 128, 128
      %33 = vsyncadd [#allocation6], %s32
      %s34 = sshll.u32 [#allocation5], 4
      %s35 = int_to_ptr.vmem [resolvable:$true] %s34
      %40 = dma.hbm_to_vmem [thread:$0]  %s1, 128, %s35, [#allocation6], 64, 64, 4
    $region9: #{tpu_custom_call.1} parent=1 // pred_fallthru
      _
    // Predicated region
    $region10: #{tpu_custom_call.1} parent=1 // pred_check
      _
    $region11: #{tpu_custom_call.1} parent=1 // pred_check_branch
      %42 = sbr.rel (0) target = $region13
    $region12: #{tpu_custom_call.1} parent=1 // pred_region
      %s44 = ssub.s32 256, 256
      %45 = vsyncadd [#allocation6], %s44
      %s46 = sshll.u32 [#allocation7], 4
      %s47 = int_to_ptr.vmem [resolvable:$true] %s46
      %52 = dma.hbm_to_vmem [thread:$0]  %s2, 256, %s47, [#allocation6], 128, 128, 8
    $region13: #{tpu_custom_call.1} parent=1 // pred_fallthru
      _
    // Predicated region
    $region14: #{tpu_custom_call.1} parent=1 // pred_check
      _
    $region15: #{tpu_custom_call.1} parent=1 // pred_check_branch
      %54 = sbr.rel (0) target = $region17
    $region16: #{tpu_custom_call.1} parent=1 // pred_region
      %s56 = ssub.s32 256, 256
      %57 = vsyncadd [#allocation9], %s56
      %s58 = sshll.u32 [#allocation8], 4
      %s59 = int_to_ptr.vmem [resolvable:$true] %s58
      %64 = dma.hbm_to_vmem [thread:$0]  %s3, 256, %s59, [#allocation9], 128, 128, 8
    $region17: #{tpu_custom_call.1} parent=1 // pred_fallthru
      _
    // Predicated region
    $region18: #{tpu_custom_call.1} parent=1 // pred_check
      _
    $region19: #{tpu_custom_call.1} parent=1 // pred_check_branch
      %66 = sbr.rel (0) target = $region21
    $region20: #{tpu_custom_call.1} parent=1 // pred_region
      %s68 = ssub.s32 2048, 2048
      %69 = vsyncadd [#allocation9], %s68
      %s70 = sshll.u32 [#allocation10], 4
      %s71 = int_to_ptr.vmem [resolvable:$true] %s70
      %76 = dma.hbm_to_vmem [thread:$0]  %s4, 2048, %s71, [#allocation9], 64, 64, 4
    $region21: #{tpu_custom_call.1} parent=1 // pred_fallthru
      _
    // Predicated region
    $region22: #{tpu_custom_call.1} parent=1 // pred_check
      _
    $region23: #{tpu_custom_call.1} parent=1 // pred_check_branch
      %78 = sbr.rel (0) target = $region25
    $region24: #{tpu_custom_call.1} parent=1 // pred_region
      %79 = dma.done [#allocation3], 128
    $region25: #{tpu_custom_call.1} parent=1 // pred_fallthru
      _
    // Predicated region
    $region26: #{tpu_custom_call.1} parent=1 // pred_check
      _
    $region27: #{tpu_custom_call.1} parent=1 // pred_check_branch
      %81 = sbr.rel (0) target = $region29
    $region28: #{tpu_custom_call.1} parent=1 // pred_region
      %82 = dma.done [#allocation6], 128
    $region29: #{tpu_custom_call.1} parent=1 // pred_fallthru
      _
    // Predicated region
    $region30: #{tpu_custom_call.1} parent=1 // pred_check
      _
    $region31: #{tpu_custom_call.1} parent=1 // pred_check_branch
      %84 = sbr.rel (0) target = $region33
    $region32: #{tpu_custom_call.1} parent=1 // pred_region
      %85 = dma.done [#allocation6], 256
    $region33: #{tpu_custom_call.1} parent=1 // pred_fallthru
      _
    // Predicated region
    $region34: #{tpu_custom_call.1} parent=1 // pred_check
      _
    $region35: #{tpu_custom_call.1} parent=1 // pred_check_branch
      %87 = sbr.rel (0) target = $region37
    $region36: #{tpu_custom_call.1} parent=1 // pred_region
      %88 = dma.done [#allocation9], 256
    $region37: #{tpu_custom_call.1} parent=1 // pred_fallthru
      _
    // Predicated region
    $region38: #{tpu_custom_call.1} parent=1 // pred_check
      _
    $region39: #{tpu_custom_call.1} parent=1 // pred_check_branch
      %90 = sbr.rel (0) target = $region41
    $region40: #{tpu_custom_call.1} parent=1 // pred_region
      %91 = dma.done [#allocation9], 2048
    $region41: #{tpu_custom_call.1} parent=1 // pred_fallthru
      _
    %v93 = vld [vmem:[#allocation2] sm:$0xf]
    %v94 = vld [vmem:[#allocation2 + $0x4] sm:$0xf]
    %v95 = vld [vmem:[#allocation5] sm:$0xf]
    %v96 = vld [vmem:[#allocation5 + $0x4] sm:$0xf]
    %v97 = vld [vmem:[#allocation7] sm:$0xff]
    %v98 = vld [vmem:[#allocation7 + $0x8] sm:$0xff]
    %v99 = vld [vmem:[#allocation8] sm:$0xff]
    %v100 = vld [vmem:[#allocation8 + $0x8] sm:$0xff]
    %v101 = vld [vmem:[#allocation10] sm:$0xf]
    %v102 = vld [vmem:[#allocation10 + $0x4] sm:$0xf]
    %v103 = vld [vmem:[#allocation10 + $0x8] sm:$0xf]
    %v104 = vld [vmem:[#allocation10 + $0xc] sm:$0xf]
    %s105 = scalar_lea.vmem [#allocation10], 16
    %v106 = vld [vmem:[%s105] sm:$0xf]
    %v107 = vld [vmem:[%s105 + $0x4] sm:$0xf]
    %v108 = vld [vmem:[%s105 + $0x8] sm:$0xf]
    %v109 = vld [vmem:[%s105 + $0xc] sm:$0xf]
    %s110 = scalar_lea.vmem [#allocation10], 32
    %v111 = vld [vmem:[%s110] sm:$0xf]
    %v112 = vld [vmem:[%s110 + $0x4] sm:$0xf]
    %v113 = vld [vmem:[%s110 + $0x8] sm:$0xf]
    %v114 = vld [vmem:[%s110 + $0xc] sm:$0xf]
    %s115 = scalar_lea.vmem [#allocation10], 48
    %v116 = vld [vmem:[%s115] sm:$0xf]
    %v117 = vld [vmem:[%s115 + $0x4] sm:$0xf]
    %v118 = vld [vmem:[%s115 + $0x8] sm:$0xf]
    %v119 = vld [vmem:[%s115 + $0xc] sm:$0xf]
    %v120 = vpack.c.bf16 %v98, %v97
    %v125 = vunpack.c.l.b16 %v101
    %v126 = vunpack.c.l.b16 %v102
    %v127 = vunpack.c.l.b16 %v103
    %v128 = vunpack.c.l.b16 %v104
    %v129 = vpack.c.b16 %v126, %v125
    %v130 = vpack.c.b16 %v128, %v127
    %vm133 = vcmask 261120
    %v135 = vsel %vm133, %v120, 0
    %137 = vmatprep.subr.bf16.mxu0 0
    %138 = vmatpush1.bf16.msra.mxu0 %v129
    %139 = vmatprep.subr.bf16.mxu0 0
    %140 = vmatpush1.bf16.msra.mxu0 %v130
    %141 = vmatprep.subr.bf16.mxu0 0
    %142 = vmatpush1.bf16.msra.mxu0 0
    %143 = vmatprep.subr.bf16.mxu0 0
    %144 = vmatpush1.bf16.msra.mxu0 0
    %145 = vmatprep.subr.bf16.mxu0 0
    %146 = vmatpush1.bf16.msra.mxu0 0
    %147 = vmatprep.subr.bf16.mxu0 0
    %148 = vmatpush1.bf16.msra.mxu0 0
    %149 = vmatprep.subr.bf16.mxu0 0
    %150 = vmatpush1.bf16.msra.mxu0 0
    %151 = vmatprep.subr.bf16.mxu0 0
    %152 = vmatpush1.bf16.msra.mxu0 0
    %153 = vmatprep.subr.bf16.mxu0 0
    %154 = vmatpush1.bf16.msra.mxu0 0
    %155 = vmatprep.subr.bf16.mxu0 0
    %156 = vmatpush1.bf16.msra.mxu0 0
    %157 = vmatprep.subr.bf16.mxu0 0
    %158 = vmatpush1.bf16.msra.mxu0 0
    %159 = vmatprep.subr.bf16.mxu0 0
    %160 = vmatpush1.bf16.msra.mxu0 0
    %161 = vmatprep.subr.bf16.mxu0 0
    %162 = vmatpush1.bf16.msra.mxu0 0
    %163 = vmatprep.subr.bf16.mxu0 0
    %164 = vmatpush1.bf16.msra.mxu0 0
    %165 = vmatprep.subr.bf16.mxu0 0
    %166 = vmatpush1.bf16.msra.mxu0 0
    %167 = vmatprep.subr.bf16.mxu0 0
    %168 = vmatpush1.bf16.msra.mxu0 0
    %169 = vmatprep.mubr.bf16.mxu0 0
    %170 = vmatmul.mubr.bf16.gmra.mrb[0].mxu0 %v135
    %v171 = vpop.f32.mrb[0].mxu0
    %v172 = vadd.f32 0.0, %v171
    %v173 = vpop.f32.mrb[0].mxu0
    %v174 = vpop.f32.mrb[0].mxu0
    %v175 = vadd.f32 0.0, %v174
    %v176 = vpop.f32.mrb[0].mxu0
    %177 = vdwg.mxu0
    %v178 = vpack.c.bf16 %v175, %v172
    %v181 = vunpack.c.l.b16 %v95
    %v182 = vunpack.c.l.b16 %v96
    %v183 = vpack.c.b16 %v182, %v181
    %vm184 = vcmask 130048
    %v186 = vsel %vm184, %v183, 0
    %188 = vmatprep.subr.bf16.mxu0 0
    %189 = vmatpush1.bf16.msra.mxu0 %v178
    %190 = vmatprep.subr.bf16.mxu0 0
    %191 = vmatpush1.bf16.msra.mxu0 0
    %192 = vmatprep.subr.bf16.mxu0 0
    %193 = vmatpush1.bf16.msra.mxu0 0
    %194 = vmatprep.subr.bf16.mxu0 0
    %195 = vmatpush1.bf16.msra.mxu0 0
    %196 = vmatprep.subr.bf16.mxu0 0
    %197 = vmatpush1.bf16.msra.mxu0 0
    %198 = vmatprep.subr.bf16.mxu0 0
    %199 = vmatpush1.bf16.msra.mxu0 0
    %200 = vmatprep.subr.bf16.mxu0 0
    %201 = vmatpush1.bf16.msra.mxu0 0
    %202 = vmatprep.subr.bf16.mxu0 0
    %203 = vmatpush1.bf16.msra.mxu0 0
    %204 = vmatprep.subr.bf16.mxu0 0
    %205 = vmatpush1.bf16.msra.mxu0 0
    %206 = vmatprep.subr.bf16.mxu0 0
    %207 = vmatpush1.bf16.msra.mxu0 0
    %208 = vmatprep.subr.bf16.mxu0 0
    %209 = vmatpush1.bf16.msra.mxu0 0
    %210 = vmatprep.subr.bf16.mxu0 0
    %211 = vmatpush1.bf16.msra.mxu0 0
    %212 = vmatprep.subr.bf16.mxu0 0
    %213 = vmatpush1.bf16.msra.mxu0 0
    %214 = vmatprep.subr.bf16.mxu0 0
    %215 = vmatpush1.bf16.msra.mxu0 0
    %216 = vmatprep.subr.bf16.mxu0 0
    %217 = vmatpush1.bf16.msra.mxu0 0
    %218 = vmatprep.subr.bf16.mxu0 0
    %219 = vmatpush1.bf16.msra.mxu0 0
    %220 = vmatprep.mubr.bf16.mxu0 0
    %221 = vmatmul.mubr.bf16.gmra.mrb[0].mxu0 %v186
    %v222 = vpop.f32.mrb[0].mxu0
    %v223 = vadd.f32 0.0, %v222
    %v224 = vpop.f32.mrb[0].mxu0
    %v225 = vpop.f32.mrb[0].mxu0
    %v226 = vadd.f32 0.0, %v225
    %v227 = vpop.f32.mrb[0].mxu0
    %228 = vdwg.mxu0
    %v229 = vpack.c.bf16 %v100, %v99
    %v234 = vunpack.c.l.b16 %v106
    %v235 = vunpack.c.l.b16 %v107
    %v236 = vunpack.c.l.b16 %v108
    %v237 = vunpack.c.l.b16 %v109
    %v238 = vpack.c.b16 %v235, %v234
    %v239 = vpack.c.b16 %v237, %v236
    %v243 = vsel %vm133, %v229, 0
    %245 = vmatprep.subr.bf16.mxu0 0
    %246 = vmatpush1.bf16.msra.mxu0 %v238
    %247 = vmatprep.subr.bf16.mxu0 0
    %248 = vmatpush1.bf16.msra.mxu0 %v239
    %249 = vmatprep.subr.bf16.mxu0 0
    %250 = vmatpush1.bf16.msra.mxu0 0
    %251 = vmatprep.subr.bf16.mxu0 0
    %252 = vmatpush1.bf16.msra.mxu0 0
    %253 = vmatprep.subr.bf16.mxu0 0
    %254 = vmatpush1.bf16.msra.mxu0 0
    %255 = vmatprep.subr.bf16.mxu0 0
    %256 = vmatpush1.bf16.msra.mxu0 0
    %257 = vmatprep.subr.bf16.mxu0 0
    %258 = vmatpush1.bf16.msra.mxu0 0
    %259 = vmatprep.subr.bf16.mxu0 0
    %260 = vmatpush1.bf16.msra.mxu0 0
    %261 = vmatprep.subr.bf16.mxu0 0
    %262 = vmatpush1.bf16.msra.mxu0 0
    %263 = vmatprep.subr.bf16.mxu0 0
    %264 = vmatpush1.bf16.msra.mxu0 0
    %265 = vmatprep.subr.bf16.mxu0 0
    %266 = vmatpush1.bf16.msra.mxu0 0
    %267 = vmatprep.subr.bf16.mxu0 0
    %268 = vmatpush1.bf16.msra.mxu0 0
    %269 = vmatprep.subr.bf16.mxu0 0
    %270 = vmatpush1.bf16.msra.mxu0 0
    %271 = vmatprep.subr.bf16.mxu0 0
    %272 = vmatpush1.bf16.msra.mxu0 0
    %273 = vmatprep.subr.bf16.mxu0 0
    %274 = vmatpush1.bf16.msra.mxu0 0
    %275 = vmatprep.subr.bf16.mxu0 0
    %276 = vmatpush1.bf16.msra.mxu0 0
    %277 = vmatprep.mubr.bf16.mxu0 0
    %278 = vmatmul.mubr.bf16.gmra.mrb[0].mxu0 %v243
    %v279 = vpop.f32.mrb[0].mxu0
    %v280 = vadd.f32 0.0, %v279
    %v281 = vpop.f32.mrb[0].mxu0
    %v282 = vpop.f32.mrb[0].mxu0
    %v283 = vadd.f32 0.0, %v282
    %v284 = vpop.f32.mrb[0].mxu0
    %285 = vdwg.mxu0
    %v286 = vpack.c.bf16 %v283, %v280
    %v289 = vunpack.c.l.b16 %v93
    %v290 = vunpack.c.l.b16 %v94
    %v291 = vpack.c.b16 %v290, %v289
    %v293 = vsel %vm184, %v291, 0
    %295 = vmatprep.subr.bf16.mxu0 0
    %296 = vmatpush1.bf16.msra.mxu0 %v286
    %297 = vmatprep.subr.bf16.mxu0 0
    %298 = vmatpush1.bf16.msra.mxu0 0
    %299 = vmatprep.subr.bf16.mxu0 0
    %300 = vmatpush1.bf16.msra.mxu0 0
    %301 = vmatprep.subr.bf16.mxu0 0
    %302 = vmatpush1.bf16.msra.mxu0 0
    %303 = vmatprep.subr.bf16.mxu0 0
    %304 = vmatpush1.bf16.msra.mxu0 0
    %305 = vmatprep.subr.bf16.mxu0 0
    %306 = vmatpush1.bf16.msra.mxu0 0
    %307 = vmatprep.subr.bf16.mxu0 0
    %308 = vmatpush1.bf16.msra.mxu0 0
    %309 = vmatprep.subr.bf16.mxu0 0
    %310 = vmatpush1.bf16.msra.mxu0 0
    %311 = vmatprep.subr.bf16.mxu0 0
    %312 = vmatpush1.bf16.msra.mxu0 0
    %313 = vmatprep.subr.bf16.mxu0 0
    %314 = vmatpush1.bf16.msra.mxu0 0
    %315 = vmatprep.subr.bf16.mxu0 0
    %316 = vmatpush1.bf16.msra.mxu0 0
    %317 = vmatprep.subr.bf16.mxu0 0
    %318 = vmatpush1.bf16.msra.mxu0 0
    %319 = vmatprep.subr.bf16.mxu0 0
    %320 = vmatpush1.bf16.msra.mxu0 0
    %321 = vmatprep.subr.bf16.mxu0 0
    %322 = vmatpush1.bf16.msra.mxu0 0
    %323 = vmatprep.subr.bf16.mxu0 0
    %324 = vmatpush1.bf16.msra.mxu0 0
    %325 = vmatprep.subr.bf16.mxu0 0
    %326 = vmatpush1.bf16.msra.mxu0 0
    %327 = vmatprep.mubr.bf16.mxu0 0
    %328 = vmatmul.mubr.bf16.gmra.mrb[0].mxu0 %v293
    %v329 = vpop.f32.mrb[0].mxu0
    %v330 = vadd.f32 0.0, %v329
    %v331 = vpop.f32.mrb[0].mxu0
    %v332 = vpop.f32.mrb[0].mxu0
    %v333 = vadd.f32 0.0, %v332
    %v334 = vpop.f32.mrb[0].mxu0
    %335 = vdwg.mxu0
    %v336 = vpack.c.bf16 %v226, %v223
    %v341 = vunpack.c.l.b16 %v111
    %v342 = vunpack.c.l.b16 %v112
    %v343 = vunpack.c.l.b16 %v113
    %v344 = vunpack.c.l.b16 %v114
    %v345 = vpack.c.b16 %v342, %v341
    %v346 = vpack.c.b16 %v344, %v343
    %v350 = vsel %vm133, %v336, 0
    %352 = vmatprep.subr.bf16.mxu0 0
    %353 = vmatpush1.bf16.msra.mxu0 %v345
    %354 = vmatprep.subr.bf16.mxu0 0
    %355 = vmatpush1.bf16.msra.mxu0 %v346
    %356 = vmatprep.subr.bf16.mxu0 0
    %357 = vmatpush1.bf16.msra.mxu0 0
    %358 = vmatprep.subr.bf16.mxu0 0
    %359 = vmatpush1.bf16.msra.mxu0 0
    %360 = vmatprep.subr.bf16.mxu0 0
    %361 = vmatpush1.bf16.msra.mxu0 0
    %362 = vmatprep.subr.bf16.mxu0 0
    %363 = vmatpush1.bf16.msra.mxu0 0
    %364 = vmatprep.subr.bf16.mxu0 0
    %365 = vmatpush1.bf16.msra.mxu0 0
    %366 = vmatprep.subr.bf16.mxu0 0
    %367 = vmatpush1.bf16.msra.mxu0 0
    %368 = vmatprep.subr.bf16.mxu0 0
    %369 = vmatpush1.bf16.msra.mxu0 0
    %370 = vmatprep.subr.bf16.mxu0 0
    %371 = vmatpush1.bf16.msra.mxu0 0
    %372 = vmatprep.subr.bf16.mxu0 0
    %373 = vmatpush1.bf16.msra.mxu0 0
    %374 = vmatprep.subr.bf16.mxu0 0
    %375 = vmatpush1.bf16.msra.mxu0 0
    %376 = vmatprep.subr.bf16.mxu0 0
    %377 = vmatpush1.bf16.msra.mxu0 0
    %378 = vmatprep.subr.bf16.mxu0 0
    %379 = vmatpush1.bf16.msra.mxu0 0
    %380 = vmatprep.subr.bf16.mxu0 0
    %381 = vmatpush1.bf16.msra.mxu0 0
    %382 = vmatprep.subr.bf16.mxu0 0
    %383 = vmatpush1.bf16.msra.mxu0 0
    %384 = vmatprep.mubr.bf16.mxu0 0
    %385 = vmatmul.mubr.bf16.gmra.mrb[0].mxu0 %v350
    %v386 = vpop.f32.mrb[0].mxu0
    %v387 = vadd.f32 0.0, %v386
    %v388 = vpop.f32.mrb[0].mxu0
    %v389 = vpop.f32.mrb[0].mxu0
    %v390 = vadd.f32 0.0, %v389
    %v391 = vpop.f32.mrb[0].mxu0
    %392 = vdwg.mxu0
    %v393 = vpack.c.bf16 %v390, %v387
    %394 = vmatprep.subr.bf16.mxu0 0
    %395 = vmatpush1.bf16.msra.mxu0 %v393
    %396 = vmatprep.subr.bf16.mxu0 0
    %397 = vmatpush1.bf16.msra.mxu0 0
    %398 = vmatprep.subr.bf16.mxu0 0
    %399 = vmatpush1.bf16.msra.mxu0 0
    %400 = vmatprep.subr.bf16.mxu0 0
    %401 = vmatpush1.bf16.msra.mxu0 0
    %402 = vmatprep.subr.bf16.mxu0 0
    %403 = vmatpush1.bf16.msra.mxu0 0
    %404 = vmatprep.subr.bf16.mxu0 0
    %405 = vmatpush1.bf16.msra.mxu0 0
    %406 = vmatprep.subr.bf16.mxu0 0
    %407 = vmatpush1.bf16.msra.mxu0 0
    %408 = vmatprep.subr.bf16.mxu0 0
    %409 = vmatpush1.bf16.msra.mxu0 0
    %410 = vmatprep.subr.bf16.mxu0 0
    %411 = vmatpush1.bf16.msra.mxu0 0
    %412 = vmatprep.subr.bf16.mxu0 0
    %413 = vmatpush1.bf16.msra.mxu0 0
    %414 = vmatprep.subr.bf16.mxu0 0
    %415 = vmatpush1.bf16.msra.mxu0 0
    %416 = vmatprep.subr.bf16.mxu0 0
    %417 = vmatpush1.bf16.msra.mxu0 0
    %418 = vmatprep.subr.bf16.mxu0 0
    %419 = vmatpush1.bf16.msra.mxu0 0
    %420 = vmatprep.subr.bf16.mxu0 0
    %421 = vmatpush1.bf16.msra.mxu0 0
    %422 = vmatprep.subr.bf16.mxu0 0
    %423 = vmatpush1.bf16.msra.mxu0 0
    %424 = vmatprep.subr.bf16.mxu0 0
    %425 = vmatpush1.bf16.msra.mxu0 0
    %426 = vmatprep.mubr.bf16.mxu0 0
    %427 = vmatmul.mubr.bf16.gmra.mrb[0].mxu0 %v293
    %v428 = vpop.f32.mrb[0].mxu0
    %v429 = vadd.f32 0.0, %v428
    %v430 = vpop.f32.mrb[0].mxu0
    %v431 = vpop.f32.mrb[0].mxu0
    %v432 = vadd.f32 0.0, %v431
    %v433 = vpop.f32.mrb[0].mxu0
    %434 = vdwg.mxu0
    %v435 = vmax.f32 %v429, 0.0
    %v436 = vmax.f32 %v432, 0.0
    %v437 = vpack.c.bf16 %v333, %v330
    %v442 = vunpack.c.l.b16 %v116
    %v443 = vunpack.c.l.b16 %v117
    %v444 = vunpack.c.l.b16 %v118
    %v445 = vunpack.c.l.b16 %v119
    %v446 = vpack.c.b16 %v443, %v442
    %v447 = vpack.c.b16 %v445, %v444
    %v451 = vsel %vm133, %v437, 0
    %453 = vmatprep.subr.bf16.mxu0 0
    %454 = vmatpush1.bf16.msra.mxu0 %v446
    %455 = vmatprep.subr.bf16.mxu0 0
    %456 = vmatpush1.bf16.msra.mxu0 %v447
    %457 = vmatprep.subr.bf16.mxu0 0
    %458 = vmatpush1.bf16.msra.mxu0 0
    %459 = vmatprep.subr.bf16.mxu0 0
    %460 = vmatpush1.bf16.msra.mxu0 0
    %461 = vmatprep.subr.bf16.mxu0 0
    %462 = vmatpush1.bf16.msra.mxu0 0
    %463 = vmatprep.subr.bf16.mxu0 0
    %464 = vmatpush1.bf16.msra.mxu0 0
    %465 = vmatprep.subr.bf16.mxu0 0
    %466 = vmatpush1.bf16.msra.mxu0 0
    %467 = vmatprep.subr.bf16.mxu0 0
    %468 = vmatpush1.bf16.msra.mxu0 0
    %469 = vmatprep.subr.bf16.mxu0 0
    %470 = vmatpush1.bf16.msra.mxu0 0
    %471 = vmatprep.subr.bf16.mxu0 0
    %472 = vmatpush1.bf16.msra.mxu0 0
    %473 = vmatprep.subr.bf16.mxu0 0
    %474 = vmatpush1.bf16.msra.mxu0 0
    %475 = vmatprep.subr.bf16.mxu0 0
    %476 = vmatpush1.bf16.msra.mxu0 0
    %477 = vmatprep.subr.bf16.mxu0 0
    %478 = vmatpush1.bf16.msra.mxu0 0
    %479 = vmatprep.subr.bf16.mxu0 0
    %480 = vmatpush1.bf16.msra.mxu0 0
    %481 = vmatprep.subr.bf16.mxu0 0
    %482 = vmatpush1.bf16.msra.mxu0 0
    %483 = vmatprep.subr.bf16.mxu0 0
    %484 = vmatpush1.bf16.msra.mxu0 0
    %485 = vmatprep.mubr.bf16.mxu0 0
    %486 = vmatmul.mubr.bf16.gmra.mrb[0].mxu0 %v451
    %v487 = vpop.f32.mrb[0].mxu0
    %v488 = vadd.f32 0.0, %v487
    %v489 = vpop.f32.mrb[0].mxu0
    %v490 = vpop.f32.mrb[0].mxu0
    %v491 = vadd.f32 0.0, %v490
    %v492 = vpop.f32.mrb[0].mxu0
    %493 = vdwg.mxu0
    %v494 = vpack.c.bf16 %v491, %v488
    %495 = vmatprep.subr.bf16.mxu0 0
    %496 = vmatpush1.bf16.msra.mxu0 %v494
    %497 = vmatprep.subr.bf16.mxu0 0
    %498 = vmatpush1.bf16.msra.mxu0 0
    %499 = vmatprep.subr.bf16.mxu0 0
    %500 = vmatpush1.bf16.msra.mxu0 0
    %501 = vmatprep.subr.bf16.mxu0 0
    %502 = vmatpush1.bf16.msra.mxu0 0
    %503 = vmatprep.subr.bf16.mxu0 0
    %504 = vmatpush1.bf16.msra.mxu0 0
    %505 = vmatprep.subr.bf16.mxu0 0
    %506 = vmatpush1.bf16.msra.mxu0 0
    %507 = vmatprep.subr.bf16.mxu0 0
    %508 = vmatpush1.bf16.msra.mxu0 0
    %509 = vmatprep.subr.bf16.mxu0 0
    %510 = vmatpush1.bf16.msra.mxu0 0
    %511 = vmatprep.subr.bf16.mxu0 0
    %512 = vmatpush1.bf16.msra.mxu0 0
    %513 = vmatprep.subr.bf16.mxu0 0
    %514 = vmatpush1.bf16.msra.mxu0 0
    %515 = vmatprep.subr.bf16.mxu0 0
    %516 = vmatpush1.bf16.msra.mxu0 0
    %517 = vmatprep.subr.bf16.mxu0 0
    %518 = vmatpush1.bf16.msra.mxu0 0
    %519 = vmatprep.subr.bf16.mxu0 0
    %520 = vmatpush1.bf16.msra.mxu0 0
    %521 = vmatprep.subr.bf16.mxu0 0
    %522 = vmatpush1.bf16.msra.mxu0 0
    %523 = vmatprep.subr.bf16.mxu0 0
    %524 = vmatpush1.bf16.msra.mxu0 0
    %525 = vmatprep.subr.bf16.mxu0 0
    %526 = vmatpush1.bf16.msra.mxu0 0
    %527 = vmatprep.mubr.bf16.mxu0 0
    %528 = vmatmul.mubr.bf16.gmra.mrb[0].mxu0 %v186
    %v529 = vpop.f32.mrb[0].mxu0
    %v530 = vadd.f32 0.0, %v529
    %v531 = vpop.f32.mrb[0].mxu0
    %v532 = vpop.f32.mrb[0].mxu0
    %v533 = vadd.f32 0.0, %v532
    %v534 = vpop.f32.mrb[0].mxu0
    %535 = vdwg.mxu0
    %v536 = vmax.f32 %v530, 0.0
    %v537 = vmax.f32 %v533, 0.0
    %v538 = vadd.f32 %v97, %v435
    %v539 = vadd.f32 %v98, %v436
    %v540 = vadd.f32 %v99, %v536
    %v541 = vadd.f32 %v100, %v537
    %s542 = scalar_lea.vmem [#allocation10], 64
    %v543 = vld [vmem:[%s542] sm:$0xf]
    %v544 = vld [vmem:[%s542 + $0x4] sm:$0xf]
    %v545 = vld [vmem:[%s542 + $0x8] sm:$0xf]
    %v546 = vld [vmem:[%s542 + $0xc] sm:$0xf]
    %s547 = scalar_lea.vmem [#allocation10], 80
    %v548 = vld [vmem:[%s547] sm:$0xf]
    %v549 = vld [vmem:[%s547 + $0x4] sm:$0xf]
    %v550 = vld [vmem:[%s547 + $0x8] sm:$0xf]
    %v551 = vld [vmem:[%s547 + $0xc] sm:$0xf]
    %s552 = scalar_lea.vmem [#allocation10], 96
    %v553 = vld [vmem:[%s552] sm:$0xf]
    %v554 = vld [vmem:[%s552 + $0x4] sm:$0xf]
    %v555 = vld [vmem:[%s552 + $0x8] sm:$0xf]
    %v556 = vld [vmem:[%s552 + $0xc] sm:$0xf]
    %s557 = scalar_lea.vmem [#allocation10], 112
    %v558 = vld [vmem:[%s557] sm:$0xf]
    %v559 = vld [vmem:[%s557 + $0x4] sm:$0xf]
    %v560 = vld [vmem:[%s557 + $0x8] sm:$0xf]
    %v561 = vld [vmem:[%s557 + $0xc] sm:$0xf]
    %v562 = vpack.c.bf16 %v436, %v435
    %v567 = vunpack.c.l.b16 %v543
    %v568 = vunpack.c.l.b16 %v544
    %v569 = vunpack.c.l.b16 %v545
    %v570 = vunpack.c.l.b16 %v546
    %v571 = vpack.c.b16 %v568, %v567
    %v572 = vpack.c.b16 %v570, %v569
    %v576 = vsel %vm133, %v562, 0
    %578 = vmatprep.subr.bf16.mxu0 0
    %579 = vmatpush1.bf16.msra.mxu0 %v571
    %580 = vmatprep.subr.bf16.mxu0 0
    %581 = vmatpush1.bf16.msra.mxu0 %v572
    %582 = vmatprep.subr.bf16.mxu0 0
    %583 = vmatpush1.bf16.msra.mxu0 0
    %584 = vmatprep.subr.bf16.mxu0 0
    %585 = vmatpush1.bf16.msra.mxu0 0
    %586 = vmatprep.subr.bf16.mxu0 0
    %587 = vmatpush1.bf16.msra.mxu0 0
    %588 = vmatprep.subr.bf16.mxu0 0
    %589 = vmatpush1.bf16.msra.mxu0 0
    %590 = vmatprep.subr.bf16.mxu0 0
    %591 = vmatpush1.bf16.msra.mxu0 0
    %592 = vmatprep.subr.bf16.mxu0 0
    %593 = vmatpush1.bf16.msra.mxu0 0
    %594 = vmatprep.subr.bf16.mxu0 0
    %595 = vmatpush1.bf16.msra.mxu0 0
    %596 = vmatprep.subr.bf16.mxu0 0
    %597 = vmatpush1.bf16.msra.mxu0 0
    %598 = vmatprep.subr.bf16.mxu0 0
    %599 = vmatpush1.bf16.msra.mxu0 0
    %600 = vmatprep.subr.bf16.mxu0 0
    %601 = vmatpush1.bf16.msra.mxu0 0
    %602 = vmatprep.subr.bf16.mxu0 0
    %603 = vmatpush1.bf16.msra.mxu0 0
    %604 = vmatprep.subr.bf16.mxu0 0
    %605 = vmatpush1.bf16.msra.mxu0 0
    %606 = vmatprep.subr.bf16.mxu0 0
    %607 = vmatpush1.bf16.msra.mxu0 0
    %608 = vmatprep.subr.bf16.mxu0 0
    %609 = vmatpush1.bf16.msra.mxu0 0
    %610 = vmatprep.mubr.bf16.mxu0 0
    %611 = vmatmul.mubr.bf16.gmra.mrb[0].mxu0 %v576
    %v612 = vpop.f32.mrb[0].mxu0
    %v613 = vadd.f32 0.0, %v612
    %v614 = vpop.f32.mrb[0].mxu0
    %v615 = vpop.f32.mrb[0].mxu0
    %v616 = vadd.f32 0.0, %v615
    %v617 = vpop.f32.mrb[0].mxu0
    %618 = vdwg.mxu0
    %v619 = vpack.c.bf16 %v616, %v613
    %620 = vmatprep.subr.bf16.mxu0 0
    %621 = vmatpush1.bf16.msra.mxu0 %v619
    %622 = vmatprep.subr.bf16.mxu0 0
    %623 = vmatpush1.bf16.msra.mxu0 0
    %624 = vmatprep.subr.bf16.mxu0 0
    %625 = vmatpush1.bf16.msra.mxu0 0
    %626 = vmatprep.subr.bf16.mxu0 0
    %627 = vmatpush1.bf16.msra.mxu0 0
    %628 = vmatprep.subr.bf16.mxu0 0
    %629 = vmatpush1.bf16.msra.mxu0 0
    %630 = vmatprep.subr.bf16.mxu0 0
    %631 = vmatpush1.bf16.msra.mxu0 0
    %632 = vmatprep.subr.bf16.mxu0 0
    %633 = vmatpush1.bf16.msra.mxu0 0
    %634 = vmatprep.subr.bf16.mxu0 0
    %635 = vmatpush1.bf16.msra.mxu0 0
    %636 = vmatprep.subr.bf16.mxu0 0
    %637 = vmatpush1.bf16.msra.mxu0 0
    %638 = vmatprep.subr.bf16.mxu0 0
    %639 = vmatpush1.bf16.msra.mxu0 0
    %640 = vmatprep.subr.bf16.mxu0 0
    %641 = vmatpush1.bf16.msra.mxu0 0
    %642 = vmatprep.subr.bf16.mxu0 0
    %643 = vmatpush1.bf16.msra.mxu0 0
    %644 = vmatprep.subr.bf16.mxu0 0
    %645 = vmatpush1.bf16.msra.mxu0 0
    %646 = vmatprep.subr.bf16.mxu0 0
    %647 = vmatpush1.bf16.msra.mxu0 0
    %648 = vmatprep.subr.bf16.mxu0 0
    %649 = vmatpush1.bf16.msra.mxu0 0
    %650 = vmatprep.subr.bf16.mxu0 0
    %651 = vmatpush1.bf16.msra.mxu0 0
    %652 = vmatprep.mubr.bf16.mxu0 0
    %653 = vmatmul.mubr.bf16.gmra.mrb[0].mxu0 %v186
    %v654 = vpop.f32.mrb[0].mxu0
    %v655 = vadd.f32 0.0, %v654
    %v656 = vpop.f32.mrb[0].mxu0
    %v657 = vpop.f32.mrb[0].mxu0
    %v658 = vadd.f32 0.0, %v657
    %v659 = vpop.f32.mrb[0].mxu0
    %660 = vdwg.mxu0
    %v661 = vpack.c.bf16 %v537, %v536
    %v666 = vunpack.c.l.b16 %v548
    %v667 = vunpack.c.l.b16 %v549
    %v668 = vunpack.c.l.b16 %v550
    %v669 = vunpack.c.l.b16 %v551
    %v670 = vpack.c.b16 %v667, %v666
    %v671 = vpack.c.b16 %v669, %v668
    %v675 = vsel %vm133, %v661, 0
    %677 = vmatprep.subr.bf16.mxu0 0
    %678 = vmatpush1.bf16.msra.mxu0 %v670
    %679 = vmatprep.subr.bf16.mxu0 0
    %680 = vmatpush1.bf16.msra.mxu0 %v671
    %681 = vmatprep.subr.bf16.mxu0 0
    %682 = vmatpush1.bf16.msra.mxu0 0
    %683 = vmatprep.subr.bf16.mxu0 0
    %684 = vmatpush1.bf16.msra.mxu0 0
    %685 = vmatprep.subr.bf16.mxu0 0
    %686 = vmatpush1.bf16.msra.mxu0 0
    %687 = vmatprep.subr.bf16.mxu0 0
    %688 = vmatpush1.bf16.msra.mxu0 0
    %689 = vmatprep.subr.bf16.mxu0 0
    %690 = vmatpush1.bf16.msra.mxu0 0
    %691 = vmatprep.subr.bf16.mxu0 0
    %692 = vmatpush1.bf16.msra.mxu0 0
    %693 = vmatprep.subr.bf16.mxu0 0
    %694 = vmatpush1.bf16.msra.mxu0 0
    %695 = vmatprep.subr.bf16.mxu0 0
    %696 = vmatpush1.bf16.msra.mxu0 0
    %697 = vmatprep.subr.bf16.mxu0 0
    %698 = vmatpush1.bf16.msra.mxu0 0
    %699 = vmatprep.subr.bf16.mxu0 0
    %700 = vmatpush1.bf16.msra.mxu0 0
    %701 = vmatprep.subr.bf16.mxu0 0
    %702 = vmatpush1.bf16.msra.mxu0 0
    %703 = vmatprep.subr.bf16.mxu0 0
    %704 = vmatpush1.bf16.msra.mxu0 0
    %705 = vmatprep.subr.bf16.mxu0 0
    %706 = vmatpush1.bf16.msra.mxu0 0
    %707 = vmatprep.subr.bf16.mxu0 0
    %708 = vmatpush1.bf16.msra.mxu0 0
    %709 = vmatprep.mubr.bf16.mxu0 0
    %710 = vmatmul.mubr.bf16.gmra.mrb[0].mxu0 %v675
    %v711 = vpop.f32.mrb[0].mxu0
    %v712 = vadd.f32 0.0, %v711
    %v713 = vpop.f32.mrb[0].mxu0
    %v714 = vpop.f32.mrb[0].mxu0
    %v715 = vadd.f32 0.0, %v714
    %v716 = vpop.f32.mrb[0].mxu0
    %717 = vdwg.mxu0
    %v718 = vpack.c.bf16 %v715, %v712
    %719 = vmatprep.subr.bf16.mxu0 0
    %720 = vmatpush1.bf16.msra.mxu0 %v718
    %721 = vmatprep.subr.bf16.mxu0 0
    %722 = vmatpush1.bf16.msra.mxu0 0
    %723 = vmatprep.subr.bf16.mxu0 0
    %724 = vmatpush1.bf16.msra.mxu0 0
    %725 = vmatprep.subr.bf16.mxu0 0
    %726 = vmatpush1.bf16.msra.mxu0 0
    %727 = vmatprep.subr.bf16.mxu0 0
    %728 = vmatpush1.bf16.msra.mxu0 0
    %729 = vmatprep.subr.bf16.mxu0 0
    %730 = vmatpush1.bf16.msra.mxu0 0
    %731 = vmatprep.subr.bf16.mxu0 0
    %732 = vmatpush1.bf16.msra.mxu0 0
    %733 = vmatprep.subr.bf16.mxu0 0
    %734 = vmatpush1.bf16.msra.mxu0 0
    %735 = vmatprep.subr.bf16.mxu0 0
    %736 = vmatpush1.bf16.msra.mxu0 0
    %737 = vmatprep.subr.bf16.mxu0 0
    %738 = vmatpush1.bf16.msra.mxu0 0
    %739 = vmatprep.subr.bf16.mxu0 0
    %740 = vmatpush1.bf16.msra.mxu0 0
    %741 = vmatprep.subr.bf16.mxu0 0
    %742 = vmatpush1.bf16.msra.mxu0 0
    %743 = vmatprep.subr.bf16.mxu0 0
    %744 = vmatpush1.bf16.msra.mxu0 0
    %745 = vmatprep.subr.bf16.mxu0 0
    %746 = vmatpush1.bf16.msra.mxu0 0
    %747 = vmatprep.subr.bf16.mxu0 0
    %748 = vmatpush1.bf16.msra.mxu0 0
    %749 = vmatprep.subr.bf16.mxu0 0
    %750 = vmatpush1.bf16.msra.mxu0 0
    %751 = vmatprep.mubr.bf16.mxu0 0
    %752 = vmatmul.mubr.bf16.gmra.mrb[0].mxu0 %v293
    %v753 = vpop.f32.mrb[0].mxu0
    %v754 = vadd.f32 0.0, %v753
    %v755 = vpop.f32.mrb[0].mxu0
    %v756 = vpop.f32.mrb[0].mxu0
    %v757 = vadd.f32 0.0, %v756
    %v758 = vpop.f32.mrb[0].mxu0
    %759 = vdwg.mxu0
    %v760 = vpack.c.bf16 %v658, %v655
    %v765 = vunpack.c.l.b16 %v553
    %v766 = vunpack.c.l.b16 %v554
    %v767 = vunpack.c.l.b16 %v555
    %v768 = vunpack.c.l.b16 %v556
    %v769 = vpack.c.b16 %v766, %v765
    %v770 = vpack.c.b16 %v768, %v767
    %v774 = vsel %vm133, %v760, 0
    %776 = vmatprep.subr.bf16.mxu0 0
    %777 = vmatpush1.bf16.msra.mxu0 %v769
    %778 = vmatprep.subr.bf16.mxu0 0
    %779 = vmatpush1.bf16.msra.mxu0 %v770
    %780 = vmatprep.subr.bf16.mxu0 0
    %781 = vmatpush1.bf16.msra.mxu0 0
    %782 = vmatprep.subr.bf16.mxu0 0
    %783 = vmatpush1.bf16.msra.mxu0 0
    %784 = vmatprep.subr.bf16.mxu0 0
    %785 = vmatpush1.bf16.msra.mxu0 0
    %786 = vmatprep.subr.bf16.mxu0 0
    %787 = vmatpush1.bf16.msra.mxu0 0
    %788 = vmatprep.subr.bf16.mxu0 0
    %789 = vmatpush1.bf16.msra.mxu0 0
    %790 = vmatprep.subr.bf16.mxu0 0
    %791 = vmatpush1.bf16.msra.mxu0 0
    %792 = vmatprep.subr.bf16.mxu0 0
    %793 = vmatpush1.bf16.msra.mxu0 0
    %794 = vmatprep.subr.bf16.mxu0 0
    %795 = vmatpush1.bf16.msra.mxu0 0
    %796 = vmatprep.subr.bf16.mxu0 0
    %797 = vmatpush1.bf16.msra.mxu0 0
    %798 = vmatprep.subr.bf16.mxu0 0
    %799 = vmatpush1.bf16.msra.mxu0 0
    %800 = vmatprep.subr.bf16.mxu0 0
    %801 = vmatpush1.bf16.msra.mxu0 0
    %802 = vmatprep.subr.bf16.mxu0 0
    %803 = vmatpush1.bf16.msra.mxu0 0
    %804 = vmatprep.subr.bf16.mxu0 0
    %805 = vmatpush1.bf16.msra.mxu0 0
    %806 = vmatprep.subr.bf16.mxu0 0
    %807 = vmatpush1.bf16.msra.mxu0 0
    %808 = vmatprep.mubr.bf16.mxu0 0
    %809 = vmatmul.mubr.bf16.gmra.mrb[0].mxu0 %v774
    %v810 = vpop.f32.mrb[0].mxu0
    %v811 = vadd.f32 0.0, %v810
    %v812 = vpop.f32.mrb[0].mxu0
    %v813 = vpop.f32.mrb[0].mxu0
    %v814 = vadd.f32 0.0, %v813
    %v815 = vpop.f32.mrb[0].mxu0
    %816 = vdwg.mxu0
    %v817 = vpack.c.bf16 %v814, %v811
    %818 = vmatprep.subr.bf16.mxu0 0
    %819 = vmatpush1.bf16.msra.mxu0 %v817
    %820 = vmatprep.subr.bf16.mxu0 0
    %821 = vmatpush1.bf16.msra.mxu0 0
    %822 = vmatprep.subr.bf16.mxu0 0
    %823 = vmatpush1.bf16.msra.mxu0 0
    %824 = vmatprep.subr.bf16.mxu0 0
    %825 = vmatpush1.bf16.msra.mxu0 0
    %826 = vmatprep.subr.bf16.mxu0 0
    %827 = vmatpush1.bf16.msra.mxu0 0
    %828 = vmatprep.subr.bf16.mxu0 0
    %829 = vmatpush1.bf16.msra.mxu0 0
    %830 = vmatprep.subr.bf16.mxu0 0
    %831 = vmatpush1.bf16.msra.mxu0 0
    %832 = vmatprep.subr.bf16.mxu0 0
    %833 = vmatpush1.bf16.msra.mxu0 0
    %834 = vmatprep.subr.bf16.mxu0 0
    %835 = vmatpush1.bf16.msra.mxu0 0
    %836 = vmatprep.subr.bf16.mxu0 0
    %837 = vmatpush1.bf16.msra.mxu0 0
    %838 = vmatprep.subr.bf16.mxu0 0
    %839 = vmatpush1.bf16.msra.mxu0 0
    %840 = vmatprep.subr.bf16.mxu0 0
    %841 = vmatpush1.bf16.msra.mxu0 0
    %842 = vmatprep.subr.bf16.mxu0 0
    %843 = vmatpush1.bf16.msra.mxu0 0
    %844 = vmatprep.subr.bf16.mxu0 0
    %845 = vmatpush1.bf16.msra.mxu0 0
    %846 = vmatprep.subr.bf16.mxu0 0
    %847 = vmatpush1.bf16.msra.mxu0 0
    %848 = vmatprep.subr.bf16.mxu0 0
    %849 = vmatpush1.bf16.msra.mxu0 0
    %850 = vmatprep.mubr.bf16.mxu0 0
    %851 = vmatmul.mubr.bf16.gmra.mrb[0].mxu0 %v293
    %v852 = vpop.f32.mrb[0].mxu0
    %v853 = vadd.f32 0.0, %v852
    %v854 = vpop.f32.mrb[0].mxu0
    %v855 = vpop.f32.mrb[0].mxu0
    %v856 = vadd.f32 0.0, %v855
    %v857 = vpop.f32.mrb[0].mxu0
    %858 = vdwg.mxu0
    %v859 = vmax.f32 %v853, 0.0
    %v860 = vmax.f32 %v856, 0.0
    %v861 = vpack.c.bf16 %v757, %v754
    %v866 = vunpack.c.l.b16 %v558
    %v867 = vunpack.c.l.b16 %v559
    %v868 = vunpack.c.l.b16 %v560
    %v869 = vunpack.c.l.b16 %v561
    %v870 = vpack.c.b16 %v867, %v866
    %v871 = vpack.c.b16 %v869, %v868
    %v875 = vsel %vm133, %v861, 0
    %877 = vmatprep.subr.bf16.mxu0 0
    %878 = vmatpush1.bf16.msra.mxu0 %v870
    %879 = vmatprep.subr.bf16.mxu0 0
    %880 = vmatpush1.bf16.msra.mxu0 %v871
    %881 = vmatprep.subr.bf16.mxu0 0
    %882 = vmatpush1.bf16.msra.mxu0 0
    %883 = vmatprep.subr.bf16.mxu0 0
    %884 = vmatpush1.bf16.msra.mxu0 0
    %885 = vmatprep.subr.bf16.mxu0 0
    %886 = vmatpush1.bf16.msra.mxu0 0
    %887 = vmatprep.subr.bf16.mxu0 0
    %888 = vmatpush1.bf16.msra.mxu0 0
    %889 = vmatprep.subr.bf16.mxu0 0
    %890 = vmatpush1.bf16.msra.mxu0 0
    %891 = vmatprep.subr.bf16.mxu0 0
    %892 = vmatpush1.bf16.msra.mxu0 0
    %893 = vmatprep.subr.bf16.mxu0 0
    %894 = vmatpush1.bf16.msra.mxu0 0
    %895 = vmatprep.subr.bf16.mxu0 0
    %896 = vmatpush1.bf16.msra.mxu0 0
    %897 = vmatprep.subr.bf16.mxu0 0
    %898 = vmatpush1.bf16.msra.mxu0 0
    %899 = vmatprep.subr.bf16.mxu0 0
    %900 = vmatpush1.bf16.msra.mxu0 0
    %901 = vmatprep.subr.bf16.mxu0 0
    %902 = vmatpush1.bf16.msra.mxu0 0
    %903 = vmatprep.subr.bf16.mxu0 0
    %904 = vmatpush1.bf16.msra.mxu0 0
    %905 = vmatprep.subr.bf16.mxu0 0
    %906 = vmatpush1.bf16.msra.mxu0 0
    %907 = vmatprep.subr.bf16.mxu0 0
    %908 = vmatpush1.bf16.msra.mxu0 0
    %909 = vmatprep.mubr.bf16.mxu0 0
    %910 = vmatmul.mubr.bf16.gmra.mrb[0].mxu0 %v875
    %v911 = vpop.f32.mrb[0].mxu0
    %v912 = vadd.f32 0.0, %v911
    %v913 = vpop.f32.mrb[0].mxu0
    %v914 = vpop.f32.mrb[0].mxu0
    %v915 = vadd.f32 0.0, %v914
    %v916 = vpop.f32.mrb[0].mxu0
    %917 = vdwg.mxu0
    %v918 = vpack.c.bf16 %v915, %v912
    %919 = vmatprep.subr.bf16.mxu0 0
    %920 = vmatpush1.bf16.msra.mxu0 %v918
    %921 = vmatprep.subr.bf16.mxu0 0
    %922 = vmatpush1.bf16.msra.mxu0 0
    %923 = vmatprep.subr.bf16.mxu0 0
    %924 = vmatpush1.bf16.msra.mxu0 0
    %925 = vmatprep.subr.bf16.mxu0 0
    %926 = vmatpush1.bf16.msra.mxu0 0
    %927 = vmatprep.subr.bf16.mxu0 0
    %928 = vmatpush1.bf16.msra.mxu0 0
    %929 = vmatprep.subr.bf16.mxu0 0
    %930 = vmatpush1.bf16.msra.mxu0 0
    %931 = vmatprep.subr.bf16.mxu0 0
    %932 = vmatpush1.bf16.msra.mxu0 0
    %933 = vmatprep.subr.bf16.mxu0 0
    %934 = vmatpush1.bf16.msra.mxu0 0
    %935 = vmatprep.subr.bf16.mxu0 0
    %936 = vmatpush1.bf16.msra.mxu0 0
    %937 = vmatprep.subr.bf16.mxu0 0
    %938 = vmatpush1.bf16.msra.mxu0 0
    %939 = vmatprep.subr.bf16.mxu0 0
    %940 = vmatpush1.bf16.msra.mxu0 0
    %941 = vmatprep.subr.bf16.mxu0 0
    %942 = vmatpush1.bf16.msra.mxu0 0
    %943 = vmatprep.subr.bf16.mxu0 0
    %944 = vmatpush1.bf16.msra.mxu0 0
    %945 = vmatprep.subr.bf16.mxu0 0
    %946 = vmatpush1.bf16.msra.mxu0 0
    %947 = vmatprep.subr.bf16.mxu0 0
    %948 = vmatpush1.bf16.msra.mxu0 0
    %949 = vmatprep.subr.bf16.mxu0 0
    %950 = vmatpush1.bf16.msra.mxu0 0
    %951 = vmatprep.mubr.bf16.mxu0 0
    %952 = vmatmul.mubr.bf16.gmra.mrb[0].mxu0 %v186
    %v953 = vpop.f32.mrb[0].mxu0
    %v954 = vadd.f32 0.0, %v953
    %v955 = vpop.f32.mrb[0].mxu0
    %v956 = vpop.f32.mrb[0].mxu0
    %v957 = vadd.f32 0.0, %v956
    %v958 = vpop.f32.mrb[0].mxu0
    %959 = vdwg.mxu0
    %v960 = vmax.f32 %v954, 0.0
    %v961 = vmax.f32 %v957, 0.0
    %v962 = vadd.f32 %v538, %v859
    %v963 = vadd.f32 %v539, %v860
    %v964 = vadd.f32 %v540, %v960
    %v965 = vadd.f32 %v541, %v961
    %v966 = vmul.f32 %v962, 0.33333334
    %v967 = vmul.f32 %v963, 0.33333334
    %968 = vst.msk [vmem:[#allocation11] sm:$0xff] %vm133, %v966
    %969 = vst.msk [vmem:[#allocation11 + $0x8] sm:$0xff] %vm133, %v967
    %v970 = vmul.f32 %v964, 0.33333334
    %v971 = vmul.f32 %v965, 0.33333334
    %972 = vst.msk [vmem:[#allocation12] sm:$0xff] %vm133, %v970
    %973 = vst.msk [vmem:[#allocation12 + $0x8] sm:$0xff] %vm133, %v971
    // Predicated region
    $region42: #{tpu_custom_call.1} parent=1 // pred_check
      _
    $region43: #{tpu_custom_call.1} parent=1 // pred_check_branch
      %975 = sbr.rel (0) target = $region45
    $region44: #{tpu_custom_call.1} parent=1 // pred_region
      %s977 = ssub.s32 256, 256
      %978 = vsyncadd [#allocation4], %s977
      %s979 = sshll.u32 [#allocation11], 4
      %s980 = int_to_ptr.vmem [resolvable:$true] %s979
      %985 = dma.vmem_to_hbm [thread:$0]  %s980, 256, %s5, [#allocation4], 128, 128, 8
    $region45: #{tpu_custom_call.1} parent=1 // pred_fallthru
      _
    // Predicated region
    $region46: #{tpu_custom_call.1} parent=1 // pred_check
      _
    $region47: #{tpu_custom_call.1} parent=1 // pred_check_branch
      %987 = sbr.rel (0) target = $region49
    $region48: #{tpu_custom_call.1} parent=1 // pred_region
      %s989 = ssub.s32 256, 256
      %990 = vsyncadd [#allocation13], %s989
      %s991 = sshll.u32 [#allocation12], 4
      %s992 = int_to_ptr.vmem [resolvable:$true] %s991
      %997 = dma.vmem_to_hbm [thread:$0]  %s992, 256, %s6, [#allocation13], 128, 128, 8
    $region49: #{tpu_custom_call.1} parent=1 // pred_fallthru
      _
    // Predicated region
    $region50: #{tpu_custom_call.1} parent=1 // pred_check
      _
    $region51: #{tpu_custom_call.1} parent=1 // pred_check_branch
      %999 = sbr.rel (0) target = $region53
    $region52: #{tpu_custom_call.1} parent=1 // pred_region
      %1000 = dma.done [#allocation4], 256
    $region53: #{tpu_custom_call.1} parent=1 // pred_fallthru
      _
    // Predicated region
    $region54: #{tpu_custom_call.1} parent=1 // pred_check
      _
    $region55: #{tpu_custom_call.1} parent=1 // pred_check_branch
      %1002 = sbr.rel (0) target = $region57
    $region56: #{tpu_custom_call.1} parent=1 // pred_region
      %1003 = dma.done [#allocation13], 256
    $region57: #{tpu_custom_call.1} parent=1 // pred_fallthru
      _
    %1004 = vsyncpa [#allocation3], 1
    %1005 = vsyncpa [#allocation6], 1
    %1006 = vsyncpa [#allocation9], 1
    %1007 = vsyncpa [#allocation4], 1
    %1008 = vsyncpa [#allocation13], 1

</llo_original>
